<compile_context>
chip_gen: v6e
topology: v6e:2x2x1
jax: 0.10.0
libtpu: 0.0.40
codegen_flags: <defaults>
</compile_context>

<pallas_src>
import functools

import jax
import jax.numpy as jnp
from jax import lax
from jax.experimental import pallas as pl
from jax.experimental.pallas import tpu as pltpu

EPS = 1e-5  # torch.nn.GroupNorm default eps


# --------------------------- in-kernel helpers ---------------------------
def _mish_fast(y):
    # mish(y) = y * tanh(softplus(y)); with t = e^y*(e^y+2), tanh(softplus(y)) = t/(t+2).
    # Keeps torch's softplus threshold=20 behaviour via the where fallback.
    e = jnp.exp(jnp.minimum(y, 20.0))
    t = e * (e + 2.0)
    return jnp.where(y > 20.0, y, y * t / (t + 2.0))


def _reflect_pad_lanes(x, pad, horizon):
    """Reflect-pad the lane (last) axis of a (C, H) tile entirely in VMEM."""
    if pad == 0:
        return x
    left = [x[:, j:j + 1] for j in range(pad, 0, -1)]                     # x[pad] .. x[1]
    right = [x[:, j:j + 1] for j in range(horizon - 2, horizon - 2 - pad, -1)]
    return jnp.concatenate(left + [x] + right, axis=-1)                   # (C, H + 2*pad)


def _conv_gn_mish(x, w_folded, bias, gamma, beta, gdown, gup,
                  ksize, horizon, n_groups):
    """Conv1d(reflect) -> GroupNorm -> Mish on one (C_in, H) tile, result (C_out, H)."""
    pad = ksize // 2
    xpad = _reflect_pad_lanes(x, pad, horizon)
    # im2col: stack the K shifted views on the sublane axis -> a single MXU matmul
    xcol = jnp.concatenate([xpad[:, k:k + horizon] for k in range(ksize)], axis=0)
    acc = jnp.dot(w_folded, xcol, preferred_element_type=jnp.float32) + bias  # (Cout, H)

    cout = acc.shape[0]
    cg = cout // n_groups
    inv_n = 1.0 / float(cg * horizon)

    # GroupNorm statistics: per-channel lane sums, then tiny group reductions.
    s = jnp.sum(acc, axis=-1, keepdims=True)                              # (Cout, 1)
    s2 = jnp.sum(acc * acc, axis=-1, keepdims=True)                       # (Cout, 1)
    stats = jnp.concatenate([s, s2], axis=-1)                             # (Cout, 2)
    gstats = jnp.dot(gdown, stats, preferred_element_type=jnp.float32)    # (G, 2)
    gmean = gstats[:, 0:1] * inv_n
    gmean2 = gstats[:, 1:2] * inv_n
    gvar = jnp.maximum(gmean2 - gmean * gmean, 0.0)                       # clamp >= 0
    ginv = lax.rsqrt(gvar + EPS)
    per_ch = jnp.dot(gup, jnp.concatenate([gmean, ginv], axis=-1),
                     preferred_element_type=jnp.float32)                  # (Cout, 2)
    xn = (acc - per_ch[:, 0:1]) * per_ch[:, 1:2]
    return _mish_fast(xn * gamma + beta)


# ------------------------------- kernel -------------------------------
def fused_block_kernel(x_ref, w1_ref, b1_ref, g1_ref, be1_ref,
                       w2_ref, b2_ref, g2_ref, be2_ref,
                       gdown_ref, gup_ref, wr_ref, br_ref, o_ref, *,
                       ksize, horizon, n_groups, identity_res):
    x = x_ref[0]                                                          # (Cin, H)
    h1 = _conv_gn_mish(x, w1_ref[...], b1_ref[...], g1_ref[...], be1_ref[...],
                       gdown_ref[...], gup_ref[...], ksize, horizon, n_groups)
    h2 = _conv_gn_mish(h1, w2_ref[...], b2_ref[...], g2_ref[...], be2_ref[...],
                       gdown_ref[...], gup_ref[...], ksize, horizon, n_groups)
    if identity_res:
        res = x                                                           # nn.Identity()
    else:
        res = jnp.dot(wr_ref[...], x, preferred_element_type=jnp.float32) + br_ref[...]
    o_ref[0] = (h2 + res).astype(o_ref.dtype)


# ------------------------------- wrapper -------------------------------
def residual_temporal_block(x, params, kernel_size=5, n_groups=8):
    """x: (B, inp_channels, horizon) -> (B, out_channels, horizon)."""
    B, cin, H = x.shape
    K = kernel_size
    w1, w2 = params["w1"], params["w2"]
    cout = w1.shape[0]

    # Fold torch-layout (Cout, Cin, K) conv weights to (Cout, K*Cin), k-major rows
    # to match the in-kernel im2col stacking order.
    w1f = jnp.transpose(w1, (0, 2, 1)).reshape(cout, K * cin)
    w2f = jnp.transpose(w2, (0, 2, 1)).reshape(cout, K * cout)

    # Group-membership matrices (horizon-independent, tiny: Cout*G each).
    cg = cout // n_groups
    gid = jnp.arange(cout) // cg
    gup = (gid[:, None] == jnp.arange(n_groups)[None, :]).astype(jnp.float32)  # (Cout, G)
    gdown = gup.T                                                               # (G, Cout)

    identity_res = params["wr"] is None
    if identity_res:
        wr = jnp.eye(cout, dtype=jnp.float32)          # present but unused in kernel
        br = jnp.zeros((cout, 1), jnp.float32)
    else:
        wr = params["wr"]
        br = params["br"][:, None]

    kern = functools.partial(fused_block_kernel, ksize=K, horizon=H,
                             n_groups=n_groups, identity_res=identity_res)
    col = lambda b: (0, 0)

    return pl.pallas_call(
        kern,
        out_shape=jax.ShapeDtypeStruct((B, cout, H), jnp.float32),
        grid=(B,),
        in_specs=[
            pl.BlockSpec((1, cin, H), lambda b: (b, 0, 0)),     # x (read once)
            pl.BlockSpec((cout, K * cin), col),                  # w1 folded
            pl.BlockSpec((cout, 1), col),                        # b1
            pl.BlockSpec((cout, 1), col),                        # gamma1
            pl.BlockSpec((cout, 1), col),                        # beta1
            pl.BlockSpec((cout, K * cout), col),                 # w2 folded
            pl.BlockSpec((cout, 1), col),                        # b2
            pl.BlockSpec((cout, 1), col),                        # gamma2
            pl.BlockSpec((cout, 1), col),                        # beta2
            pl.BlockSpec((n_groups, cout), col),                 # group down-map
            pl.BlockSpec((cout, n_groups), col),                 # group up-map
            pl.BlockSpec((cout, cin), col),                      # residual weight
            pl.BlockSpec((cout, 1), col),                        # residual bias
        ],
        out_specs=pl.BlockSpec((1, cout, H), lambda b: (b, 0, 0)),
        compiler_params=pltpu.CompilerParams(dimension_semantics=("parallel",)),
    )(x, w1f, params["b1"][:, None], params["g1"][:, None], params["be1"][:, None],
      w2f, params["b2"][:, None], params["g2"][:, None], params["be2"][:, None],
      gdown, gup, wr, br)


# ---------------- pure-JAX reference (correctness check) ----------------
def _ref_mish(y):
    sp = jnp.where(y > 20.0, y, jnp.log1p(jnp.exp(jnp.minimum(y, 20.0))))
    return y * jnp.tanh(sp)


def _ref_conv1d_block(x, w, b, gamma, beta, n_groups, ksize):
    pad = ksize // 2
    xp = jnp.pad(x, ((0, 0), (0, 0), (pad, pad)), mode="reflect")
    B, _, H = x.shape
    y = b[None, :, None]
    for k in range(ksize):
        y = y + jnp.einsum("oc,bch->boh", w[:, :, k], xp[:, :, k:k + H])
    cout = y.shape[1]
    cg = cout // n_groups
    yg = y.reshape(B, n_groups, cg * H)
    mean = yg.mean(-1, keepdims=True)
    var = yg.var(-1, keepdims=True)
    yn = ((yg - mean) / jnp.sqrt(var + EPS)).reshape(B, cout, H)
    return _ref_mish(yn * gamma[None, :, None] + beta[None, :, None])


def _ref_forward(x, params, n_groups, ksize):
    h1 = _ref_conv1d_block(x, params["w1"], params["b1"], params["g1"],
                           params["be1"], n_groups, ksize)
    h2 = _ref_conv1d_block(h1, params["w2"], params["b2"], params["g2"],
                           params["be2"], n_groups, ksize)
    if params["wr"] is None:
        res = x
    else:
        res = jnp.einsum("oc,bch->boh", params["wr"], x) + params["br"][None, :, None]
    return h2 + res


# ---------------- deterministic parameter construction ----------------
def make_params(key, inp_channels, out_channels, kernel_size=5):
    ks = jax.random.split(key, 10)
    w1 = 0.1 * jax.random.normal(ks[0], (out_channels, inp_channels, kernel_size), jnp.float32)
    w2 = 0.1 * jax.random.normal(ks[1], (out_channels, out_channels, kernel_size), jnp.float32)
    b1 = 0.1 * jax.random.normal(ks[2], (out_channels,), jnp.float32)
    b2 = 0.1 * jax.random.normal(ks[3], (out_channels,), jnp.float32)
    g1 = 1.0 + 0.05 * jax.random.normal(ks[4], (out_channels,), jnp.float32)
    g2 = 1.0 + 0.05 * jax.random.normal(ks[5], (out_channels,), jnp.float32)
    be1 = 0.05 * jax.random.normal(ks[6], (out_channels,), jnp.float32)
    be2 = 0.05 * jax.random.normal(ks[7], (out_channels,), jnp.float32)
    if inp_channels != out_channels:
        wr = 0.1 * jax.random.normal(ks[8], (out_channels, inp_channels), jnp.float32)
        br = 0.1 * jax.random.normal(ks[9], (out_channels,), jnp.float32)
    else:
        wr, br = None, None  # nn.Identity(): kernel skips the residual matmul entirely
    return {"w1": w1, "b1": b1, "g1": g1, "be1": be1,
            "w2": w2, "b2": b2, "g2": g2, "be2": be2,
            "wr": wr, "br": br}


if __name__ == "__main__":
    B, inp_channels, out_channels, horizon = 2, 4, 16, 16
    kernel_size, n_groups = 5, 8

    key = jax.random.PRNGKey(0)
    kx, kp = jax.random.split(key)
    x = jax.random.normal(kx, (B, inp_channels, horizon), jnp.float32)
    params = make_params(kp, inp_channels, out_channels, kernel_size)

    out = jax.block_until_ready(
        residual_temporal_block(x, params, kernel_size, n_groups))

    ref = _ref_forward(x, params, n_groups, kernel_size)
    assert out.shape == (B, out_channels, horizon)
    assert jnp.allclose(out, ref, atol=1e-4, rtol=1e-4), "mismatch vs pure-JAX reference"

    print("KERNEL_OK")
</pallas_src>

<mosaic_0001>
module attributes {stable_mosaic.version = 11 : i64} {
  func.func @fused_block_kernel(%arg0: i32, %arg1: memref<1x4x16xf32, #tpu.memory_space<vmem>>, %arg2: memref<16x20xf32, #tpu.memory_space<vmem>>, %arg3: memref<16x1xf32, #tpu.memory_space<vmem>>, %arg4: memref<16x1xf32, #tpu.memory_space<vmem>>, %arg5: memref<16x1xf32, #tpu.memory_space<vmem>>, %arg6: memref<16x80xf32, #tpu.memory_space<vmem>>, %arg7: memref<16x1xf32, #tpu.memory_space<vmem>>, %arg8: memref<16x1xf32, #tpu.memory_space<vmem>>, %arg9: memref<16x1xf32, #tpu.memory_space<vmem>>, %arg10: memref<8x16xf32, #tpu.memory_space<vmem>>, %arg11: memref<16x8xf32, #tpu.memory_space<vmem>>, %arg12: memref<16x4xf32, #tpu.memory_space<vmem>>, %arg13: memref<16x1xf32, #tpu.memory_space<vmem>>, %arg14: memref<1x16x16xf32, #tpu.memory_space<vmem>>) attributes {dimension_semantics = [#tpu.dimension_semantics<parallel>], iteration_bounds = array<i64: 2>, scalar_prefetch = 0 : i64, scratch_operands = 0 : i64, tpu.core_type = #tpu.core_type<tc>, window_params = [{transform_indices = @transform_0, window_bounds = array<i64: 1, 4, 16>}, {pipeline_mode = #tpu.pipeline_mode<synchronous>, transform_indices = @transform_1, window_bounds = array<i64: 16, 20>}, {pipeline_mode = #tpu.pipeline_mode<synchronous>, transform_indices = @transform_2, window_bounds = array<i64: 16, 1>}, {pipeline_mode = #tpu.pipeline_mode<synchronous>, transform_indices = @transform_3, window_bounds = array<i64: 16, 1>}, {pipeline_mode = #tpu.pipeline_mode<synchronous>, transform_indices = @transform_4, window_bounds = array<i64: 16, 1>}, {pipeline_mode = #tpu.pipeline_mode<synchronous>, transform_indices = @transform_5, window_bounds = array<i64: 16, 80>}, {pipeline_mode = #tpu.pipeline_mode<synchronous>, transform_indices = @transform_6, window_bounds = array<i64: 16, 1>}, {pipeline_mode = #tpu.pipeline_mode<synchronous>, transform_indices = @transform_7, window_bounds = array<i64: 16, 1>}, {pipeline_mode = #tpu.pipeline_mode<synchronous>, transform_indices = @transform_8, window_bounds = array<i64: 16, 1>}, {pipeline_mode = #tpu.pipeline_mode<synchronous>, transform_indices = @transform_9, window_bounds = array<i64: 8, 16>}, {pipeline_mode = #tpu.pipeline_mode<synchronous>, transform_indices = @transform_10, window_bounds = array<i64: 16, 8>}, {pipeline_mode = #tpu.pipeline_mode<synchronous>, transform_indices = @transform_11, window_bounds = array<i64: 16, 4>}, {pipeline_mode = #tpu.pipeline_mode<synchronous>, transform_indices = @transform_12, window_bounds = array<i64: 16, 1>}, {transform_indices = @transform_13, window_bounds = array<i64: 1, 16, 16>}]} {
    %c0 = arith.constant 0 : index
    %c0_0 = arith.constant 0 : index
    %c0_1 = arith.constant 0 : index
    %0 = vector.load %arg1[%c0, %c0_0, %c0_1] : memref<1x4x16xf32, #tpu.memory_space<vmem>>, vector<1x4x16xf32>
    %1 = vector.shape_cast %0 : vector<1x4x16xf32> to vector<4x16xf32>
    %c0_2 = arith.constant 0 : index
    %c0_3 = arith.constant 0 : index
    %2 = vector.load %arg2[%c0_2, %c0_3] : memref<16x20xf32, #tpu.memory_space<vmem>>, vector<16x20xf32>
    %c0_4 = arith.constant 0 : index
    %c0_5 = arith.constant 0 : index
    %3 = vector.load %arg3[%c0_4, %c0_5] : memref<16x1xf32, #tpu.memory_space<vmem>>, vector<16x1xf32>
    %c0_6 = arith.constant 0 : index
    %c0_7 = arith.constant 0 : index
    %4 = vector.load %arg4[%c0_6, %c0_7] : memref<16x1xf32, #tpu.memory_space<vmem>>, vector<16x1xf32>
    %c0_8 = arith.constant 0 : index
    %c0_9 = arith.constant 0 : index
    %5 = vector.load %arg5[%c0_8, %c0_9] : memref<16x1xf32, #tpu.memory_space<vmem>>, vector<16x1xf32>
    %c0_10 = arith.constant 0 : index
    %c0_11 = arith.constant 0 : index
    %6 = vector.load %arg10[%c0_10, %c0_11] : memref<8x16xf32, #tpu.memory_space<vmem>>, vector<8x16xf32>
    %c0_12 = arith.constant 0 : index
    %c0_13 = arith.constant 0 : index
    %7 = vector.load %arg11[%c0_12, %c0_13] : memref<16x8xf32, #tpu.memory_space<vmem>>, vector<16x8xf32>
    %8 = vector.extract_strided_slice %1 {offsets = [0, 2], sizes = [4, 1], strides = [1, 1]} : vector<4x16xf32> to vector<4x1xf32>
    %9 = vector.extract_strided_slice %1 {offsets = [0, 1], sizes = [4, 1], strides = [1, 1]} : vector<4x16xf32> to vector<4x1xf32>
    %10 = vector.extract_strided_slice %1 {offsets = [0, 14], sizes = [4, 1], strides = [1, 1]} : vector<4x16xf32> to vector<4x1xf32>
    %11 = vector.extract_strided_slice %1 {offsets = [0, 13], sizes = [4, 1], strides = [1, 1]} : vector<4x16xf32> to vector<4x1xf32>
    %12 = tpu.concatenate %8, %9, %1, %10, %11 in 1 : vector<4x1xf32>, vector<4x1xf32>, vector<4x16xf32>, vector<4x1xf32>, vector<4x1xf32> -> vector<4x20xf32>
    %13 = vector.extract_strided_slice %12 {offsets = [0, 0], sizes = [4, 16], strides = [1, 1]} : vector<4x20xf32> to vector<4x16xf32>
    %14 = vector.extract_strided_slice %12 {offsets = [0, 1], sizes = [4, 16], strides = [1, 1]} : vector<4x20xf32> to vector<4x16xf32>
    %15 = vector.extract_strided_slice %12 {offsets = [0, 2], sizes = [4, 16], strides = [1, 1]} : vector<4x20xf32> to vector<4x16xf32>
    %16 = vector.extract_strided_slice %12 {offsets = [0, 3], sizes = [4, 16], strides = [1, 1]} : vector<4x20xf32> to vector<4x16xf32>
    %17 = vector.extract_strided_slice %12 {offsets = [0, 4], sizes = [4, 16], strides = [1, 1]} : vector<4x20xf32> to vector<4x16xf32>
    %18 = tpu.concatenate %13, %14, %15, %16, %17 in 0 : vector<4x16xf32>, vector<4x16xf32>, vector<4x16xf32>, vector<4x16xf32>, vector<4x16xf32> -> vector<20x16xf32>
    %cst = arith.constant dense<0.000000e+00> : vector<16x16xf32>
    %19 = tpu.matmul %2, %18, %cst {dimension_numbers = #tpu.dot_dimension_numbers<[1], [0], [0], [1], [0, 0, 1, 1], [], []>} : vector<16x20xf32>, vector<20x16xf32>, vector<16x16xf32> -> vector<16x16xf32>
    %20 = vector.broadcast %3 : vector<16x1xf32> to vector<16x16xf32>
    %21 = arith.addf %19, %20 : vector<16x16xf32>
    %cst_14 = arith.constant dense<0.000000e+00> : vector<16xf32>
    %22 = vector.multi_reduction <add>, %21, %cst_14 [1] : vector<16x16xf32> to vector<16xf32>
    %23 = vector.shape_cast %22 : vector<16xf32> to vector<16x1xf32>
    %24 = arith.mulf %21, %21 : vector<16x16xf32>
    %cst_15 = arith.constant dense<0.000000e+00> : vector<16xf32>
    %25 = vector.multi_reduction <add>, %24, %cst_15 [1] : vector<16x16xf32> to vector<16xf32>
    %26 = vector.shape_cast %25 : vector<16xf32> to vector<16x1xf32>
    %27 = tpu.concatenate %23, %26 in 1 : vector<16x1xf32>, vector<16x1xf32> -> vector<16x2xf32>
    %cst_16 = arith.constant dense<0.000000e+00> : vector<8x2xf32>
    %28 = tpu.matmul %6, %27, %cst_16 {dimension_numbers = #tpu.dot_dimension_numbers<[1], [0], [0], [1], [0, 0, 1, 1], [], []>} : vector<8x16xf32>, vector<16x2xf32>, vector<8x2xf32> -> vector<8x2xf32>
    %29 = vector.extract_strided_slice %28 {offsets = [0, 0], sizes = [8, 1], strides = [1, 1]} : vector<8x2xf32> to vector<8x1xf32>
    %cst_17 = arith.constant 3.125000e-02 : f32
    %30 = vector.broadcast %cst_17 : f32 to vector<8x1xf32>
    %31 = arith.mulf %29, %30 : vector<8x1xf32>
    %32 = vector.extract_strided_slice %28 {offsets = [0, 1], sizes = [8, 1], strides = [1, 1]} : vector<8x2xf32> to vector<8x1xf32>
    %cst_18 = arith.constant 3.125000e-02 : f32
    %33 = vector.broadcast %cst_18 : f32 to vector<8x1xf32>
    %34 = arith.mulf %32, %33 : vector<8x1xf32>
    %35 = arith.mulf %31, %31 : vector<8x1xf32>
    %36 = arith.subf %34, %35 : vector<8x1xf32>
    %cst_19 = arith.constant 0.000000e+00 : f32
    %37 = vector.broadcast %cst_19 : f32 to vector<8x1xf32>
    %38 = arith.maximumf %36, %37 : vector<8x1xf32>
    %cst_20 = arith.constant 9.99999974E-6 : f32
    %39 = vector.broadcast %cst_20 : f32 to vector<8x1xf32>
    %40 = arith.addf %38, %39 : vector<8x1xf32>
    %41 = math.rsqrt %40 : vector<8x1xf32>
    %42 = tpu.concatenate %31, %41 in 1 : vector<8x1xf32>, vector<8x1xf32> -> vector<8x2xf32>
    %cst_21 = arith.constant dense<0.000000e+00> : vector<16x2xf32>
    %43 = tpu.matmul %7, %42, %cst_21 {dimension_numbers = #tpu.dot_dimension_numbers<[1], [0], [0], [1], [0, 0, 1, 1], [], []>} : vector<16x8xf32>, vector<8x2xf32>, vector<16x2xf32> -> vector<16x2xf32>
    %44 = vector.extract_strided_slice %43 {offsets = [0, 0], sizes = [16, 1], strides = [1, 1]} : vector<16x2xf32> to vector<16x1xf32>
    %45 = vector.broadcast %44 : vector<16x1xf32> to vector<16x16xf32>
    %46 = arith.subf %21, %45 : vector<16x16xf32>
    %47 = vector.extract_strided_slice %43 {offsets = [0, 1], sizes = [16, 1], strides = [1, 1]} : vector<16x2xf32> to vector<16x1xf32>
    %48 = vector.broadcast %47 : vector<16x1xf32> to vector<16x16xf32>
    %49 = arith.mulf %46, %48 : vector<16x16xf32>
    %50 = vector.broadcast %4 : vector<16x1xf32> to vector<16x16xf32>
    %51 = arith.mulf %49, %50 : vector<16x16xf32>
    %52 = vector.broadcast %5 : vector<16x1xf32> to vector<16x16xf32>
    %53 = arith.addf %51, %52 : vector<16x16xf32>
    %cst_22 = arith.constant 2.000000e+01 : f32
    %54 = vector.broadcast %cst_22 : f32 to vector<16x16xf32>
    %55 = arith.minimumf %53, %54 : vector<16x16xf32>
    %56 = math.exp %55 : vector<16x16xf32>
    %cst_23 = arith.constant 2.000000e+00 : f32
    %57 = vector.broadcast %cst_23 : f32 to vector<16x16xf32>
    %58 = arith.addf %56, %57 : vector<16x16xf32>
    %59 = arith.mulf %56, %58 : vector<16x16xf32>
    %cst_24 = arith.constant 2.000000e+01 : f32
    %60 = vector.broadcast %cst_24 : f32 to vector<16x16xf32>
    %61 = arith.cmpf ogt, %53, %60 : vector<16x16xf32>
    %62 = arith.mulf %53, %59 : vector<16x16xf32>
    %cst_25 = arith.constant 2.000000e+00 : f32
    %63 = vector.broadcast %cst_25 : f32 to vector<16x16xf32>
    %64 = arith.addf %59, %63 : vector<16x16xf32>
    %65 = arith.divf %62, %64 : vector<16x16xf32>
    %66 = arith.select %61, %53, %65 : vector<16x16xi1>, vector<16x16xf32>
    %c0_26 = arith.constant 0 : index
    %c0_27 = arith.constant 0 : index
    %67 = vector.load %arg6[%c0_26, %c0_27] : memref<16x80xf32, #tpu.memory_space<vmem>>, vector<16x80xf32>
    %c0_28 = arith.constant 0 : index
    %c0_29 = arith.constant 0 : index
    %68 = vector.load %arg7[%c0_28, %c0_29] : memref<16x1xf32, #tpu.memory_space<vmem>>, vector<16x1xf32>
    %c0_30 = arith.constant 0 : index
    %c0_31 = arith.constant 0 : index
    %69 = vector.load %arg8[%c0_30, %c0_31] : memref<16x1xf32, #tpu.memory_space<vmem>>, vector<16x1xf32>
    %c0_32 = arith.constant 0 : index
    %c0_33 = arith.constant 0 : index
    %70 = vector.load %arg9[%c0_32, %c0_33] : memref<16x1xf32, #tpu.memory_space<vmem>>, vector<16x1xf32>
    %c0_34 = arith.constant 0 : index
    %c0_35 = arith.constant 0 : index
    %71 = vector.load %arg10[%c0_34, %c0_35] : memref<8x16xf32, #tpu.memory_space<vmem>>, vector<8x16xf32>
    %c0_36 = arith.constant 0 : index
    %c0_37 = arith.constant 0 : index
    %72 = vector.load %arg11[%c0_36, %c0_37] : memref<16x8xf32, #tpu.memory_space<vmem>>, vector<16x8xf32>
    %73 = vector.extract_strided_slice %66 {offsets = [0, 2], sizes = [16, 1], strides = [1, 1]} : vector<16x16xf32> to vector<16x1xf32>
    %74 = vector.extract_strided_slice %66 {offsets = [0, 1], sizes = [16, 1], strides = [1, 1]} : vector<16x16xf32> to vector<16x1xf32>
    %75 = vector.extract_strided_slice %66 {offsets = [0, 14], sizes = [16, 1], strides = [1, 1]} : vector<16x16xf32> to vector<16x1xf32>
    %76 = vector.extract_strided_slice %66 {offsets = [0, 13], sizes = [16, 1], strides = [1, 1]} : vector<16x16xf32> to vector<16x1xf32>
    %77 = tpu.concatenate %73, %74, %66, %75, %76 in 1 : vector<16x1xf32>, vector<16x1xf32>, vector<16x16xf32>, vector<16x1xf32>, vector<16x1xf32> -> vector<16x20xf32>
    %78 = vector.extract_strided_slice %77 {offsets = [0, 0], sizes = [16, 16], strides = [1, 1]} : vector<16x20xf32> to vector<16x16xf32>
    %79 = vector.extract_strided_slice %77 {offsets = [0, 1], sizes = [16, 16], strides = [1, 1]} : vector<16x20xf32> to vector<16x16xf32>
    %80 = vector.extract_strided_slice %77 {offsets = [0, 2], sizes = [16, 16], strides = [1, 1]} : vector<16x20xf32> to vector<16x16xf32>
    %81 = vector.extract_strided_slice %77 {offsets = [0, 3], sizes = [16, 16], strides = [1, 1]} : vector<16x20xf32> to vector<16x16xf32>
    %82 = vector.extract_strided_slice %77 {offsets = [0, 4], sizes = [16, 16], strides = [1, 1]} : vector<16x20xf32> to vector<16x16xf32>
    %83 = tpu.concatenate %78, %79, %80, %81, %82 in 0 : vector<16x16xf32>, vector<16x16xf32>, vector<16x16xf32>, vector<16x16xf32>, vector<16x16xf32> -> vector<80x16xf32>
    %cst_38 = arith.constant dense<0.000000e+00> : vector<16x16xf32>
    %84 = tpu.matmul %67, %83, %cst_38 {dimension_numbers = #tpu.dot_dimension_numbers<[1], [0], [0], [1], [0, 0, 1, 1], [], []>} : vector<16x80xf32>, vector<80x16xf32>, vector<16x16xf32> -> vector<16x16xf32>
    %85 = vector.broadcast %68 : vector<16x1xf32> to vector<16x16xf32>
    %86 = arith.addf %84, %85 : vector<16x16xf32>
    %cst_39 = arith.constant dense<0.000000e+00> : vector<16xf32>
    %87 = vector.multi_reduction <add>, %86, %cst_39 [1] : vector<16x16xf32> to vector<16xf32>
    %88 = vector.shape_cast %87 : vector<16xf32> to vector<16x1xf32>
    %89 = arith.mulf %86, %86 : vector<16x16xf32>
    %cst_40 = arith.constant dense<0.000000e+00> : vector<16xf32>
    %90 = vector.multi_reduction <add>, %89, %cst_40 [1] : vector<16x16xf32> to vector<16xf32>
    %91 = vector.shape_cast %90 : vector<16xf32> to vector<16x1xf32>
    %92 = tpu.concatenate %88, %91 in 1 : vector<16x1xf32>, vector<16x1xf32> -> vector<16x2xf32>
    %cst_41 = arith.constant dense<0.000000e+00> : vector<8x2xf32>
    %93 = tpu.matmul %71, %92, %cst_41 {dimension_numbers = #tpu.dot_dimension_numbers<[1], [0], [0], [1], [0, 0, 1, 1], [], []>} : vector<8x16xf32>, vector<16x2xf32>, vector<8x2xf32> -> vector<8x2xf32>
    %94 = vector.extract_strided_slice %93 {offsets = [0, 0], sizes = [8, 1], strides = [1, 1]} : vector<8x2xf32> to vector<8x1xf32>
    %cst_42 = arith.constant 3.125000e-02 : f32
    %95 = vector.broadcast %cst_42 : f32 to vector<8x1xf32>
    %96 = arith.mulf %94, %95 : vector<8x1xf32>
    %97 = vector.extract_strided_slice %93 {offsets = [0, 1], sizes = [8, 1], strides = [1, 1]} : vector<8x2xf32> to vector<8x1xf32>
    %cst_43 = arith.constant 3.125000e-02 : f32
    %98 = vector.broadcast %cst_43 : f32 to vector<8x1xf32>
    %99 = arith.mulf %97, %98 : vector<8x1xf32>
    %100 = arith.mulf %96, %96 : vector<8x1xf32>
    %101 = arith.subf %99, %100 : vector<8x1xf32>
    %cst_44 = arith.constant 0.000000e+00 : f32
    %102 = vector.broadcast %cst_44 : f32 to vector<8x1xf32>
    %103 = arith.maximumf %101, %102 : vector<8x1xf32>
    %cst_45 = arith.constant 9.99999974E-6 : f32
    %104 = vector.broadcast %cst_45 : f32 to vector<8x1xf32>
    %105 = arith.addf %103, %104 : vector<8x1xf32>
    %106 = math.rsqrt %105 : vector<8x1xf32>
    %107 = tpu.concatenate %96, %106 in 1 : vector<8x1xf32>, vector<8x1xf32> -> vector<8x2xf32>
    %cst_46 = arith.constant dense<0.000000e+00> : vector<16x2xf32>
    %108 = tpu.matmul %72, %107, %cst_46 {dimension_numbers = #tpu.dot_dimension_numbers<[1], [0], [0], [1], [0, 0, 1, 1], [], []>} : vector<16x8xf32>, vector<8x2xf32>, vector<16x2xf32> -> vector<16x2xf32>
    %109 = vector.extract_strided_slice %108 {offsets = [0, 0], sizes = [16, 1], strides = [1, 1]} : vector<16x2xf32> to vector<16x1xf32>
    %110 = vector.broadcast %109 : vector<16x1xf32> to vector<16x16xf32>
    %111 = arith.subf %86, %110 : vector<16x16xf32>
    %112 = vector.extract_strided_slice %108 {offsets = [0, 1], sizes = [16, 1], strides = [1, 1]} : vector<16x2xf32> to vector<16x1xf32>
    %113 = vector.broadcast %112 : vector<16x1xf32> to vector<16x16xf32>
    %114 = arith.mulf %111, %113 : vector<16x16xf32>
    %115 = vector.broadcast %69 : vector<16x1xf32> to vector<16x16xf32>
    %116 = arith.mulf %114, %115 : vector<16x16xf32>
    %117 = vector.broadcast %70 : vector<16x1xf32> to vector<16x16xf32>
    %118 = arith.addf %116, %117 : vector<16x16xf32>
    %cst_47 = arith.constant 2.000000e+01 : f32
    %119 = vector.broadcast %cst_47 : f32 to vector<16x16xf32>
    %120 = arith.minimumf %118, %119 : vector<16x16xf32>
    %121 = math.exp %120 : vector<16x16xf32>
    %cst_48 = arith.constant 2.000000e+00 : f32
    %122 = vector.broadcast %cst_48 : f32 to vector<16x16xf32>
    %123 = arith.addf %121, %122 : vector<16x16xf32>
    %124 = arith.mulf %121, %123 : vector<16x16xf32>
    %cst_49 = arith.constant 2.000000e+01 : f32
    %125 = vector.broadcast %cst_49 : f32 to vector<16x16xf32>
    %126 = arith.cmpf ogt, %118, %125 : vector<16x16xf32>
    %127 = arith.mulf %118, %124 : vector<16x16xf32>
    %cst_50 = arith.constant 2.000000e+00 : f32
    %128 = vector.broadcast %cst_50 : f32 to vector<16x16xf32>
    %129 = arith.addf %124, %128 : vector<16x16xf32>
    %130 = arith.divf %127, %129 : vector<16x16xf32>
    %131 = arith.select %126, %118, %130 : vector<16x16xi1>, vector<16x16xf32>
    %c0_51 = arith.constant 0 : index
    %c0_52 = arith.constant 0 : index
    %132 = vector.load %arg12[%c0_51, %c0_52] : memref<16x4xf32, #tpu.memory_space<vmem>>, vector<16x4xf32>
    %cst_53 = arith.constant dense<0.000000e+00> : vector<16x16xf32>
    %133 = tpu.matmul %132, %1, %cst_53 {dimension_numbers = #tpu.dot_dimension_numbers<[1], [0], [0], [1], [0, 0, 1, 1], [], []>} : vector<16x4xf32>, vector<4x16xf32>, vector<16x16xf32> -> vector<16x16xf32>
    %c0_54 = arith.constant 0 : index
    %c0_55 = arith.constant 0 : index
    %134 = vector.load %arg13[%c0_54, %c0_55] : memref<16x1xf32, #tpu.memory_space<vmem>>, vector<16x1xf32>
    %135 = vector.broadcast %134 : vector<16x1xf32> to vector<16x16xf32>
    %136 = arith.addf %133, %135 : vector<16x16xf32>
    %137 = arith.addf %131, %136 : vector<16x16xf32>
    %c0_56 = arith.constant 0 : index
    %c0_57 = arith.constant 0 : index
    %c0_58 = arith.constant 0 : index
    %138 = vector.load %arg14[%c0_56, %c0_57, %c0_58] : memref<1x16x16xf32, #tpu.memory_space<vmem>>, vector<1x16x16xf32>
    %139 = vector.shape_cast %138 : vector<1x16x16xf32> to vector<16x16xf32>
    %140 = vector.shape_cast %137 : vector<16x16xf32> to vector<1x16x16xf32>
    tpu.vector_store %arg14[%c0_56, %c0_57, %c0_58], %140 {strides = array<i32>} : memref<1x16x16xf32, #tpu.memory_space<vmem>>, vector<1x16x16xf32>,
    return
  }
  func.func @transform_0(%arg0: i32) -> (i32, i32, i32) {
    %c0_i32 = arith.constant 0 : i32
    %c0_i32_0 = arith.constant 0 : i32
    %c0_i32_1 = arith.constant 0 : i32
    return %arg0, %c0_i32, %c0_i32_0 : i32, i32, i32
  }
  func.func @transform_1(%arg0: i32) -> (i32, i32) {
    %c0_i32 = arith.constant 0 : i32
    %c0_i32_0 = arith.constant 0 : i32
    %c0_i32_1 = arith.constant 0 : i32
    return %c0_i32, %c0_i32_0 : i32, i32
  }
  func.func @transform_2(%arg0: i32) -> (i32, i32) {
    %c0_i32 = arith.constant 0 : i32
    %c0_i32_0 = arith.constant 0 : i32
    %c0_i32_1 = arith.constant 0 : i32
    return %c0_i32, %c0_i32_0 : i32, i32
  }
  func.func @transform_3(%arg0: i32) -> (i32, i32) {
    %c0_i32 = arith.constant 0 : i32
    %c0_i32_0 = arith.constant 0 : i32
    %c0_i32_1 = arith.constant 0 : i32
    return %c0_i32, %c0_i32_0 : i32, i32
  }
  func.func @transform_4(%arg0: i32) -> (i32, i32) {
    %c0_i32 = arith.constant 0 : i32
    %c0_i32_0 = arith.constant 0 : i32
    %c0_i32_1 = arith.constant 0 : i32
    return %c0_i32, %c0_i32_0 : i32, i32
  }
  func.func @transform_5(%arg0: i32) -> (i32, i32) {
    %c0_i32 = arith.constant 0 : i32
    %c0_i32_0 = arith.constant 0 : i32
    %c0_i32_1 = arith.constant 0 : i32
    return %c0_i32, %c0_i32_0 : i32, i32
  }
  func.func @transform_6(%arg0: i32) -> (i32, i32) {
    %c0_i32 = arith.constant 0 : i32
    %c0_i32_0 = arith.constant 0 : i32
    %c0_i32_1 = arith.constant 0 : i32
    return %c0_i32, %c0_i32_0 : i32, i32
  }
  func.func @transform_7(%arg0: i32) -> (i32, i32) {
    %c0_i32 = arith.constant 0 : i32
    %c0_i32_0 = arith.constant 0 : i32
    %c0_i32_1 = arith.constant 0 : i32
    return %c0_i32, %c0_i32_0 : i32, i32
  }
  func.func @transform_8(%arg0: i32) -> (i32, i32) {
    %c0_i32 = arith.constant 0 : i32
    %c0_i32_0 = arith.constant 0 : i32
    %c0_i32_1 = arith.constant 0 : i32
    return %c0_i32, %c0_i32_0 : i32, i32
  }
  func.func @transform_9(%arg0: i32) -> (i32, i32) {
    %c0_i32 = arith.constant 0 : i32
    %c0_i32_0 = arith.constant 0 : i32
    %c0_i32_1 = arith.constant 0 : i32
    return %c0_i32, %c0_i32_0 : i32, i32
  }
  func.func @transform_10(%arg0: i32) -> (i32, i32) {
    %c0_i32 = arith.constant 0 : i32
    %c0_i32_0 = arith.constant 0 : i32
    %c0_i32_1 = arith.constant 0 : i32
    return %c0_i32, %c0_i32_0 : i32, i32
  }
  func.func @transform_11(%arg0: i32) -> (i32, i32) {
    %c0_i32 = arith.constant 0 : i32
    %c0_i32_0 = arith.constant 0 : i32
    %c0_i32_1 = arith.constant 0 : i32
    return %c0_i32, %c0_i32_0 : i32, i32
  }
  func.func @transform_12(%arg0: i32) -> (i32, i32) {
    %c0_i32 = arith.constant 0 : i32
    %c0_i32_0 = arith.constant 0 : i32
    %c0_i32_1 = arith.constant 0 : i32
    return %c0_i32, %c0_i32_0 : i32, i32
  }
  func.func @transform_13(%arg0: i32) -> (i32, i32, i32) {
    %c0_i32 = arith.constant 0 : i32
    %c0_i32_0 = arith.constant 0 : i32
    %c0_i32_1 = arith.constant 0 : i32
    return %arg0, %c0_i32, %c0_i32_0 : i32, i32, i32
  }
}

</mosaic_0001>

<llo_original>
// kernel: tpu_custom_call.1
$region0: #{tpu_custom_call.1}
  #allocation0 [shape = 'u32[]', space=smem, size = 0x4, offset = 0x4, fixed_abs, tag = 'smem constant byte address 0x4 - core index']
  #allocation1 [shape = 'u32[144,128]{1,0:T(1,128)}', space=vmem, size = 0x12000, scoped, tag = 'internal scratch']
  %s0 = inlined_call_operand.vmem [shape: f32[2,4,16], index: 0, kind: input, shape index: {}]
  %s1 = inlined_call_operand.vmem [shape: f32[16,20], index: 1, kind: input, shape index: {}]
  %s2 = inlined_call_operand.vmem [shape: f32[16,1], index: 2, kind: input, shape index: {}]
  %s3 = inlined_call_operand.vmem [shape: f32[16,1], index: 3, kind: input, shape index: {}]
  %s4 = inlined_call_operand.vmem [shape: f32[16,1], index: 4, kind: input, shape index: {}]
  %s5 = inlined_call_operand.vmem [shape: f32[16,80], index: 5, kind: input, shape index: {}]
  %s6 = inlined_call_operand.vmem [shape: f32[16,1], index: 6, kind: input, shape index: {}]
  %s7 = inlined_call_operand.vmem [shape: f32[16,1], index: 7, kind: input, shape index: {}]
  %s8 = inlined_call_operand.vmem [shape: f32[16,1], index: 8, kind: input, shape index: {}]
  %s9 = inlined_call_operand.vmem [shape: f32[8,16], index: 9, kind: input, shape index: {}]
  %s10 = inlined_call_operand.vmem [shape: f32[16,8], index: 10, kind: input, shape index: {}]
  %s11 = inlined_call_operand.vmem [shape: f32[16,4], index: 11, kind: input, shape index: {}]
  %s12 = inlined_call_operand.vmem [shape: f32[16,1], index: 12, kind: input, shape index: {}]
  %s13 = inlined_call_operand.hbm [shape: f32[2,16,16], index: 13, kind: output, shape index: {}]
  %s14 = sld [smem:[#allocation0]]
  $region85: #{tpu_custom_call.1} parent=0
    _
  %s16 = ssub.s32 1, %s14
  %s17 = scalar_select 0, %s16, %s14
  $region1: #{tpu_custom_call.1} parent=0
    #allocation2 [shape = 'u8[16384]{0}', space=vmem, size = 0x4000, scoped, tag = 'output window, operand 0']
    #allocation3 [shape = 's32[2]{0}', space=sflag, size = 0x8, scoped, tag = 'scoped memory for tpu_custom_call.1']
    %18 = vsyncpa [#allocation3], 0
    %s19 = scalar_lea.sflag [#allocation3], 1
    %20 = vsyncpa %s19, 0
    loop: start=0, step=1, limit=4
    $region2: #{tpu_custom_call.1} parent=1 // loop_pre_header
      _
    $region3: #{tpu_custom_call.1} parent=1 // loop_header
      %s22 = sphi 0, %s26
      %p23 = scmp.ge.s32.totalorder %s22, 4
      %s32 = sphi 0, %s34
      %s35 = sphi 0, %s32
      %s36 = sphi 0, %s35
      %s52 = sphi 0, %s36
      %s56 = sphi 0, %s56
      %s58 = sphi 0, %s56
      %s59 = sphi 0, %s58
      %s73 = sphi 0, %s59
      %s77 = sphi 0, %s77
      %s79 = sphi 0, %s77
      %s80 = sphi 0, %s79
      %s94 = sphi 0, %s80
      %s98 = sphi 0, %s98
      %s100 = sphi 0, %s98
      %s101 = sphi 0, %s100
      %s115 = sphi 0, %s101
      %s119 = sphi 0, %s119
      %s121 = sphi 0, %s119
      %s122 = sphi 0, %s121
      %s136 = sphi 0, %s122
      %s140 = sphi 0, %s140
      %s142 = sphi 0, %s140
      %s143 = sphi 0, %s142
      %s157 = sphi 0, %s143
      %s161 = sphi 0, %s161
      %s163 = sphi 0, %s161
      %s164 = sphi 0, %s163
      %s178 = sphi 0, %s164
      %s182 = sphi 0, %s182
      %s184 = sphi 0, %s182
      %s185 = sphi 0, %s184
      %s199 = sphi 0, %s185
      %s203 = sphi 0, %s203
      %s205 = sphi 0, %s203
      %s206 = sphi 0, %s205
      %s220 = sphi 0, %s206
      %s224 = sphi 0, %s224
      %s226 = sphi 0, %s224
      %s227 = sphi 0, %s226
      %s241 = sphi 0, %s227
      %s245 = sphi 0, %s245
      %s247 = sphi 0, %s245
      %s248 = sphi 0, %s247
      %s262 = sphi 0, %s248
      %s266 = sphi 0, %s266
      %s268 = sphi 0, %s266
      %s269 = sphi 0, %s268
      %s283 = sphi 0, %s269
      %s287 = sphi 0, %s287
      %s289 = sphi 0, %s287
      %s290 = sphi 0, %s289
      %s304 = sphi 0, %s290
      %s310 = sphi 0, %s312
      %s313 = sphi 0, %s310
      %s314 = sphi 0, %s313
      %s330 = sphi 0, %s314
    $region4: #{tpu_custom_call.1} parent=1 // loop_header_branch
      %25 = sbr.rel (%p23) target = $region8
    $region5: #{tpu_custom_call.1} parent=1 // loop_body
      %s27 = ssub.s32 %s22, 1
      %s28 = ssub.s32 %s22, 2
      %s29 = sadd.s32 %s22, 1
      %s30 = ssub.s32 %s22, %s29
      %p31 = scmp.eq.s32.totalorder %s30, 0
      %s33 = sadd.s32 %s32, 1
      %s34 = scalar_select %p31, %s32, %s33
      %p37 = pneg %p31
      %p38 = scmp.eq.s32.totalorder %s22, 1
      %p39 = por %p37, %p38
      %p40 = scmp.ne.s32.totalorder %s32, %s35
      %p41 = scmp.eq.s32.totalorder %s22, 0
      %p42 = por %p40, %p41
      %p43 = scmp.ne.s32.totalorder %s32, %s35
      %p44 = scmp.eq.s32.totalorder %s27, 1
      %p45 = por %p43, %p44
      %p46 = scmp.ne.s32.totalorder %s35, %s36
      %p47 = scmp.eq.s32.totalorder %s27, 0
      %p48 = por %p46, %p47
      %p49 = scmp.ne.s32.totalorder %s35, %s36
      %p50 = scmp.eq.s32.totalorder %s28, 1
      %p51 = por %p49, %p50
      %p53 = scmp.ne.s32.totalorder %s36, %s52
      %p54 = scmp.eq.s32.totalorder %s28, 0
      %p55 = por %p53, %p54
      %s57 = sadd.s32 %s56, 1
      %p60 = scmp.eq.s32.totalorder %s22, 1
      %p61 = scmp.ne.s32.totalorder %s56, %s58
      %p62 = scmp.eq.s32.totalorder %s22, 0
      %p63 = por %p61, %p62
      %p64 = scmp.ne.s32.totalorder %s56, %s58
      %p65 = scmp.eq.s32.totalorder %s27, 1
      %p66 = por %p64, %p65
      %p67 = scmp.ne.s32.totalorder %s58, %s59
      %p68 = scmp.eq.s32.totalorder %s27, 0
      %p69 = por %p67, %p68
      %p70 = scmp.ne.s32.totalorder %s58, %s59
      %p71 = scmp.eq.s32.totalorder %s28, 1
      %p72 = por %p70, %p71
      %p74 = scmp.ne.s32.totalorder %s59, %s73
      %p75 = scmp.eq.s32.totalorder %s28, 0
      %p76 = por %p74, %p75
      %s78 = sadd.s32 %s77, 1
      %p81 = scmp.eq.s32.totalorder %s22, 1
      %p82 = scmp.ne.s32.totalorder %s77, %s79
      %p83 = scmp.eq.s32.totalorder %s22, 0
      %p84 = por %p82, %p83
      %p85 = scmp.ne.s32.totalorder %s77, %s79
      %p86 = scmp.eq.s32.totalorder %s27, 1
      %p87 = por %p85, %p86
      %p88 = scmp.ne.s32.totalorder %s79, %s80
      %p89 = scmp.eq.s32.totalorder %s27, 0
      %p90 = por %p88, %p89
      %p91 = scmp.ne.s32.totalorder %s79, %s80
      %p92 = scmp.eq.s32.totalorder %s28, 1
      %p93 = por %p91, %p92
      %p95 = scmp.ne.s32.totalorder %s80, %s94
      %p96 = scmp.eq.s32.totalorder %s28, 0
      %p97 = por %p95, %p96
      %s99 = sadd.s32 %s98, 1
      %p102 = scmp.eq.s32.totalorder %s22, 1
      %p103 = scmp.ne.s32.totalorder %s98, %s100
      %p104 = scmp.eq.s32.totalorder %s22, 0
      %p105 = por %p103, %p104
      %p106 = scmp.ne.s32.totalorder %s98, %s100
      %p107 = scmp.eq.s32.totalorder %s27, 1
      %p108 = por %p106, %p107
      %p109 = scmp.ne.s32.totalorder %s100, %s101
      %p110 = scmp.eq.s32.totalorder %s27, 0
      %p111 = por %p109, %p110
      %p112 = scmp.ne.s32.totalorder %s100, %s101
      %p113 = scmp.eq.s32.totalorder %s28, 1
      %p114 = por %p112, %p113
      %p116 = scmp.ne.s32.totalorder %s101, %s115
      %p117 = scmp.eq.s32.totalorder %s28, 0
      %p118 = por %p116, %p117
      %s120 = sadd.s32 %s119, 1
      %p123 = scmp.eq.s32.totalorder %s22, 1
      %p124 = scmp.ne.s32.totalorder %s119, %s121
      %p125 = scmp.eq.s32.totalorder %s22, 0
      %p126 = por %p124, %p125
      %p127 = scmp.ne.s32.totalorder %s119, %s121
      %p128 = scmp.eq.s32.totalorder %s27, 1
      %p129 = por %p127, %p128
      %p130 = scmp.ne.s32.totalorder %s121, %s122
      %p131 = scmp.eq.s32.totalorder %s27, 0
      %p132 = por %p130, %p131
      %p133 = scmp.ne.s32.totalorder %s121, %s122
      %p134 = scmp.eq.s32.totalorder %s28, 1
      %p135 = por %p133, %p134
      %p137 = scmp.ne.s32.totalorder %s122, %s136
      %p138 = scmp.eq.s32.totalorder %s28, 0
      %p139 = por %p137, %p138
      %s141 = sadd.s32 %s140, 1
      %p144 = scmp.eq.s32.totalorder %s22, 1
      %p145 = scmp.ne.s32.totalorder %s140, %s142
      %p146 = scmp.eq.s32.totalorder %s22, 0
      %p147 = por %p145, %p146
      %p148 = scmp.ne.s32.totalorder %s140, %s142
      %p149 = scmp.eq.s32.totalorder %s27, 1
      %p150 = por %p148, %p149
      %p151 = scmp.ne.s32.totalorder %s142, %s143
      %p152 = scmp.eq.s32.totalorder %s27, 0
      %p153 = por %p151, %p152
      %p154 = scmp.ne.s32.totalorder %s142, %s143
      %p155 = scmp.eq.s32.totalorder %s28, 1
      %p156 = por %p154, %p155
      %p158 = scmp.ne.s32.totalorder %s143, %s157
      %p159 = scmp.eq.s32.totalorder %s28, 0
      %p160 = por %p158, %p159
      %s162 = sadd.s32 %s161, 1
      %p165 = scmp.eq.s32.totalorder %s22, 1
      %p166 = scmp.ne.s32.totalorder %s161, %s163
      %p167 = scmp.eq.s32.totalorder %s22, 0
      %p168 = por %p166, %p167
      %p169 = scmp.ne.s32.totalorder %s161, %s163
      %p170 = scmp.eq.s32.totalorder %s27, 1
      %p171 = por %p169, %p170
      %p172 = scmp.ne.s32.totalorder %s163, %s164
      %p173 = scmp.eq.s32.totalorder %s27, 0
      %p174 = por %p172, %p173
      %p175 = scmp.ne.s32.totalorder %s163, %s164
      %p176 = scmp.eq.s32.totalorder %s28, 1
      %p177 = por %p175, %p176
      %p179 = scmp.ne.s32.totalorder %s164, %s178
      %p180 = scmp.eq.s32.totalorder %s28, 0
      %p181 = por %p179, %p180
      %s183 = sadd.s32 %s182, 1
      %p186 = scmp.eq.s32.totalorder %s22, 1
      %p187 = scmp.ne.s32.totalorder %s182, %s184
      %p188 = scmp.eq.s32.totalorder %s22, 0
      %p189 = por %p187, %p188
      %p190 = scmp.ne.s32.totalorder %s182, %s184
      %p191 = scmp.eq.s32.totalorder %s27, 1
      %p192 = por %p190, %p191
      %p193 = scmp.ne.s32.totalorder %s184, %s185
      %p194 = scmp.eq.s32.totalorder %s27, 0
      %p195 = por %p193, %p194
      %p196 = scmp.ne.s32.totalorder %s184, %s185
      %p197 = scmp.eq.s32.totalorder %s28, 1
      %p198 = por %p196, %p197
      %p200 = scmp.ne.s32.totalorder %s185, %s199
      %p201 = scmp.eq.s32.totalorder %s28, 0
      %p202 = por %p200, %p201
      %s204 = sadd.s32 %s203, 1
      %p207 = scmp.eq.s32.totalorder %s22, 1
      %p208 = scmp.ne.s32.totalorder %s203, %s205
      %p209 = scmp.eq.s32.totalorder %s22, 0
      %p210 = por %p208, %p209
      %p211 = scmp.ne.s32.totalorder %s203, %s205
      %p212 = scmp.eq.s32.totalorder %s27, 1
      %p213 = por %p211, %p212
      %p214 = scmp.ne.s32.totalorder %s205, %s206
      %p215 = scmp.eq.s32.totalorder %s27, 0
      %p216 = por %p214, %p215
      %p217 = scmp.ne.s32.totalorder %s205, %s206
      %p218 = scmp.eq.s32.totalorder %s28, 1
      %p219 = por %p217, %p218
      %p221 = scmp.ne.s32.totalorder %s206, %s220
      %p222 = scmp.eq.s32.totalorder %s28, 0
      %p223 = por %p221, %p222
      %s225 = sadd.s32 %s224, 1
      %p228 = scmp.eq.s32.totalorder %s22, 1
      %p229 = scmp.ne.s32.totalorder %s224, %s226
      %p230 = scmp.eq.s32.totalorder %s22, 0
      %p231 = por %p229, %p230
      %p232 = scmp.ne.s32.totalorder %s224, %s226
      %p233 = scmp.eq.s32.totalorder %s27, 1
      %p234 = por %p232, %p233
      %p235 = scmp.ne.s32.totalorder %s226, %s227
      %p236 = scmp.eq.s32.totalorder %s27, 0
      %p237 = por %p235, %p236
      %p238 = scmp.ne.s32.totalorder %s226, %s227
      %p239 = scmp.eq.s32.totalorder %s28, 1
      %p240 = por %p238, %p239
      %p242 = scmp.ne.s32.totalorder %s227, %s241
      %p243 = scmp.eq.s32.totalorder %s28, 0
      %p244 = por %p242, %p243
      %s246 = sadd.s32 %s245, 1
      %p249 = scmp.eq.s32.totalorder %s22, 1
      %p250 = scmp.ne.s32.totalorder %s245, %s247
      %p251 = scmp.eq.s32.totalorder %s22, 0
      %p252 = por %p250, %p251
      %p253 = scmp.ne.s32.totalorder %s245, %s247
      %p254 = scmp.eq.s32.totalorder %s27, 1
      %p255 = por %p253, %p254
      %p256 = scmp.ne.s32.totalorder %s247, %s248
      %p257 = scmp.eq.s32.totalorder %s27, 0
      %p258 = por %p256, %p257
      %p259 = scmp.ne.s32.totalorder %s247, %s248
      %p260 = scmp.eq.s32.totalorder %s28, 1
      %p261 = por %p259, %p260
      %p263 = scmp.ne.s32.totalorder %s248, %s262
      %p264 = scmp.eq.s32.totalorder %s28, 0
      %p265 = por %p263, %p264
      %s267 = sadd.s32 %s266, 1
      %p270 = scmp.eq.s32.totalorder %s22, 1
      %p271 = scmp.ne.s32.totalorder %s266, %s268
      %p272 = scmp.eq.s32.totalorder %s22, 0
      %p273 = por %p271, %p272
      %p274 = scmp.ne.s32.totalorder %s266, %s268
      %p275 = scmp.eq.s32.totalorder %s27, 1
      %p276 = por %p274, %p275
      %p277 = scmp.ne.s32.totalorder %s268, %s269
      %p278 = scmp.eq.s32.totalorder %s27, 0
      %p279 = por %p277, %p278
      %p280 = scmp.ne.s32.totalorder %s268, %s269
      %p281 = scmp.eq.s32.totalorder %s28, 1
      %p282 = por %p280, %p281
      %p284 = scmp.ne.s32.totalorder %s269, %s283
      %p285 = scmp.eq.s32.totalorder %s28, 0
      %p286 = por %p284, %p285
      %s288 = sadd.s32 %s287, 1
      %p291 = scmp.eq.s32.totalorder %s22, 1
      %p292 = scmp.ne.s32.totalorder %s287, %s289
      %p293 = scmp.eq.s32.totalorder %s22, 0
      %p294 = por %p292, %p293
      %p295 = scmp.ne.s32.totalorder %s287, %s289
      %p296 = scmp.eq.s32.totalorder %s27, 1
      %p297 = por %p295, %p296
      %p298 = scmp.ne.s32.totalorder %s289, %s290
      %p299 = scmp.eq.s32.totalorder %s27, 0
      %p300 = por %p298, %p299
      %p301 = scmp.ne.s32.totalorder %s289, %s290
      %p302 = scmp.eq.s32.totalorder %s28, 1
      %p303 = por %p301, %p302
      %p305 = scmp.ne.s32.totalorder %s290, %s304
      %p306 = scmp.eq.s32.totalorder %s28, 0
      %p307 = por %p305, %p306
      %s308 = ssub.s32 %s22, %s29
      %p309 = scmp.eq.s32.totalorder %s308, 0
      %s311 = sadd.s32 %s310, 1
      %s312 = scalar_select %p309, %s310, %s311
      %p315 = pneg %p309
      %p316 = scmp.eq.s32.totalorder %s22, 1
      %p317 = por %p315, %p316
      %p318 = scmp.ne.s32.totalorder %s310, %s313
      %p319 = scmp.eq.s32.totalorder %s22, 0
      %p320 = por %p318, %p319
      %p321 = scmp.ne.s32.totalorder %s310, %s313
      %p322 = scmp.eq.s32.totalorder %s27, 1
      %p323 = por %p321, %p322
      %p324 = scmp.ne.s32.totalorder %s313, %s314
      %p325 = scmp.eq.s32.totalorder %s27, 0
      %p326 = por %p324, %p325
      %p327 = scmp.ne.s32.totalorder %s313, %s314
      %p328 = scmp.eq.s32.totalorder %s28, 1
      %p329 = por %p327, %p328
      %p331 = scmp.ne.s32.totalorder %s314, %s330
      %p332 = scmp.eq.s32.totalorder %s28, 0
      %p333 = por %p331, %p332
      %p334 = scmp.le.s32.totalorder 1, %s22
      %p335 = scmp.lt.s32.totalorder %s22, 3
      %p336 = pnand %p334, %p335
      %p337 = pneg %p336
      // Predicated region
      $region9: #{tpu_custom_call.1} parent=5 // pred_check
        _
      $region10: #{tpu_custom_call.1} parent=5 // pred_check_branch
        %339 = sbr.rel (%p336) target = $region12
      $region11: #{tpu_custom_call.1} parent=5 // pred_region
        %s340 = ssub.s32 %s22, 1
        // Predicated region
        $region13: #{tpu_custom_call.1} parent=11 // pred_check
          %p341 = pneg %p69
        $region14: #{tpu_custom_call.1} parent=11 // pred_check_branch
          %343 = sbr.rel (%p341) target = $region16
        $region15: #{tpu_custom_call.1} parent=11 // pred_region
          _
        $region16: #{tpu_custom_call.1} parent=11 // pred_fallthru
          _
        // Predicated region
        $region17: #{tpu_custom_call.1} parent=11 // pred_check
          %p344 = pneg %p90
        $region18: #{tpu_custom_call.1} parent=11 // pred_check_branch
          %346 = sbr.rel (%p344) target = $region20
        $region19: #{tpu_custom_call.1} parent=11 // pred_region
          _
        $region20: #{tpu_custom_call.1} parent=11 // pred_fallthru
          _
        // Predicated region
        $region21: #{tpu_custom_call.1} parent=11 // pred_check
          %p347 = pneg %p111
        $region22: #{tpu_custom_call.1} parent=11 // pred_check_branch
          %349 = sbr.rel (%p347) target = $region24
        $region23: #{tpu_custom_call.1} parent=11 // pred_region
          _
        $region24: #{tpu_custom_call.1} parent=11 // pred_fallthru
          _
        // Predicated region
        $region25: #{tpu_custom_call.1} parent=11 // pred_check
          %p350 = pneg %p132
        $region26: #{tpu_custom_call.1} parent=11 // pred_check_branch
          %352 = sbr.rel (%p350) target = $region28
        $region27: #{tpu_custom_call.1} parent=11 // pred_region
          _
        $region28: #{tpu_custom_call.1} parent=11 // pred_fallthru
          _
        // Predicated region
        $region29: #{tpu_custom_call.1} parent=11 // pred_check
          %p353 = pneg %p153
        $region30: #{tpu_custom_call.1} parent=11 // pred_check_branch
          %355 = sbr.rel (%p353) target = $region32
        $region31: #{tpu_custom_call.1} parent=11 // pred_region
          _
        $region32: #{tpu_custom_call.1} parent=11 // pred_fallthru
          _
        // Predicated region
        $region33: #{tpu_custom_call.1} parent=11 // pred_check
          %p356 = pneg %p174
        $region34: #{tpu_custom_call.1} parent=11 // pred_check_branch
          %358 = sbr.rel (%p356) target = $region36
        $region35: #{tpu_custom_call.1} parent=11 // pred_region
          _
        $region36: #{tpu_custom_call.1} parent=11 // pred_fallthru
          _
        // Predicated region
        $region37: #{tpu_custom_call.1} parent=11 // pred_check
          %p359 = pneg %p195
        $region38: #{tpu_custom_call.1} parent=11 // pred_check_branch
          %361 = sbr.rel (%p359) target = $region40
        $region39: #{tpu_custom_call.1} parent=11 // pred_region
          _
        $region40: #{tpu_custom_call.1} parent=11 // pred_fallthru
          _
        // Predicated region
        $region41: #{tpu_custom_call.1} parent=11 // pred_check
          %p362 = pneg %p216
        $region42: #{tpu_custom_call.1} parent=11 // pred_check_branch
          %364 = sbr.rel (%p362) target = $region44
        $region43: #{tpu_custom_call.1} parent=11 // pred_region
          _
        $region44: #{tpu_custom_call.1} parent=11 // pred_fallthru
          _
        // Predicated region
        $region45: #{tpu_custom_call.1} parent=11 // pred_check
          %p365 = pneg %p237
        $region46: #{tpu_custom_call.1} parent=11 // pred_check_branch
          %367 = sbr.rel (%p365) target = $region48
        $region47: #{tpu_custom_call.1} parent=11 // pred_region
          _
        $region48: #{tpu_custom_call.1} parent=11 // pred_fallthru
          _
        // Predicated region
        $region49: #{tpu_custom_call.1} parent=11 // pred_check
          %p368 = pneg %p258
        $region50: #{tpu_custom_call.1} parent=11 // pred_check_branch
          %370 = sbr.rel (%p368) target = $region52
        $region51: #{tpu_custom_call.1} parent=11 // pred_region
          _
        $region52: #{tpu_custom_call.1} parent=11 // pred_fallthru
          _
        // Predicated region
        $region53: #{tpu_custom_call.1} parent=11 // pred_check
          %p371 = pneg %p279
        $region54: #{tpu_custom_call.1} parent=11 // pred_check_branch
          %373 = sbr.rel (%p371) target = $region56
        $region55: #{tpu_custom_call.1} parent=11 // pred_region
          _
        $region56: #{tpu_custom_call.1} parent=11 // pred_fallthru
          _
        // Predicated region
        $region57: #{tpu_custom_call.1} parent=11 // pred_check
          %p374 = pneg %p300
        $region58: #{tpu_custom_call.1} parent=11 // pred_check_branch
          %376 = sbr.rel (%p374) target = $region60
        $region59: #{tpu_custom_call.1} parent=11 // pred_region
          _
        $region60: #{tpu_custom_call.1} parent=11 // pred_fallthru
          _
      $region12: #{tpu_custom_call.1} parent=5 // pred_fallthru
        _
      %p377 = scmp.lt.s32.totalorder %s22, 2
      // Predicated region
      $region61: #{tpu_custom_call.1} parent=5 // pred_check
        %p378 = pneg %p377
      $region62: #{tpu_custom_call.1} parent=5 // pred_check_branch
        %380 = sbr.rel (%p378) target = $region64
      $region63: #{tpu_custom_call.1} parent=5 // pred_region
        // Predicated region
        $region65: #{tpu_custom_call.1} parent=63 // pred_check
          %p381 = pneg %p42
        $region66: #{tpu_custom_call.1} parent=63 // pred_check_branch
          %383 = sbr.rel (%p381) target = $region68
        $region67: #{tpu_custom_call.1} parent=63 // pred_region
          %p384 = scmp.lt.s32.totalorder %s22, 1
          %s385 = scalar_select %p384, %s22, 1
          %s386 = smul.addr %s385, 4
          %s387 = scalar_lea.vmem %s0, %s386
        $region68: #{tpu_custom_call.1} parent=63 // pred_fallthru
          _
      $region64: #{tpu_custom_call.1} parent=5 // pred_fallthru
        _
      %p388 = scmp.le.s32.totalorder 1, %s22
      %p389 = scmp.lt.s32.totalorder %s22, 3
      %p390 = pnand %p388, %p389
      %p391 = pneg %p390
      // Predicated region
      $region69: #{tpu_custom_call.1} parent=5 // pred_check
        _
      $region70: #{tpu_custom_call.1} parent=5 // pred_check_branch
        %393 = sbr.rel (%p390) target = $region72
      $region71: #{tpu_custom_call.1} parent=5 // pred_region
        %s394 = ssub.s32 %s22, 1
        %p395 = scmp.lt.s32.totalorder %s27, 1
        %s396 = scalar_select %p395, %s27, 1
        %s397 = smul.addr %s396, 4
        %s398 = scalar_lea.vmem %s0, %s397
        %p399 = pneg %p48
        %p400 = pneg %p45
        %p401 = pneg %p69
        %p402 = pneg %p66
        %p403 = pneg %p90
        %p404 = pneg %p87
        %p405 = pneg %p111
        %p406 = pneg %p108
        %p407 = pneg %p132
        %p408 = pneg %p129
        %p409 = pneg %p153
        %p410 = pneg %p150
        %p411 = pneg %p174
        %p412 = pneg %p171
        %p413 = pneg %p195
        %p414 = pneg %p192
        %p415 = pneg %p216
        %p416 = pneg %p213
        %p417 = pneg %p237
        %p418 = pneg %p234
        %p419 = pneg %p258
        %p420 = pneg %p255
        %p421 = pneg %p279
        %p422 = pneg %p276
        %p423 = pneg %p300
        %p424 = pneg %p297
        %p425 = pneg %p326
        %p426 = pneg %p323
        %s427 = sand.u32 %s313, 1
        %s428 = scalar_lea.sflag [#allocation3], %s427
        %s429 = sand.u32 %s313, 1
        %s430 = smul.addr %s429, 16
        %s431 = scalar_lea.vmem [#allocation2], %s430
        %p432 = scmp.lt.s32.totalorder %s27, 1
        %s433 = scalar_select %p432, %s27, 1
        %s434 = smul.addr %s433, 4
        %s435 = scalar_lea.vmem %s0, %s434
        %v436 = vld [vmem:[%s435] sm:$0xf]
        %v437 = vld [vmem:[%s1] sm:$0xff]
        %v438 = vld [vmem:[%s1 + $0x8] sm:$0xff]
        %v439 = vld [vmem:[%s2] sm:$0xff]
        %v440 = vld [vmem:[%s2 + $0x8] sm:$0xff]
        %v441 = vld [vmem:[%s3] sm:$0xff]
        %v442 = vld [vmem:[%s3 + $0x8] sm:$0xff]
        %v443 = vld [vmem:[%s4] sm:$0xff]
        %v444 = vld [vmem:[%s4 + $0x8] sm:$0xff]
        %v445 = vld [vmem:[%s9] sm:$0xff]
        %v446 = vld [vmem:[%s10] sm:$0xff]
        %v447 = vld [vmem:[%s10 + $0x8] sm:$0xff]
        %449 = vrot.lane.b32.xlu0 %v436, 126
        %v450 = vpop.permute.xlu0 %449
        %452 = vrot.lane.b32.xlu0 %v436, 2
        %v453 = vpop.permute.xlu0 %452
        %455 = vrot.lane.b32.xlu0 %v436, 4
        %v456 = vpop.permute.xlu0 %455
        %458 = vrot.lane.b32.xlu0 %v436, 6
        %v459 = vpop.permute.xlu0 %458
        %vm461 = vcmask 7168
        %v462 = vsel %vm461, %v450, %v436
        %vm463 = vcmask 15360
        %v464 = vsel %vm463, %v462, %v453
        %vm465 = vcmask 146432
        %v466 = vsel %vm465, %v464, %v456
        %vm467 = vcmask 154624
        %v468 = vsel %vm467, %v466, %v459
        %v470 = vrot.slane %v468, 4
        %471 = vrot.lane.b32.xlu0 %v470, 127
        %v472 = vpop.permute.xlu0 %471
        %474 = vrot.lane.b32.xlu0 %v468, 126
        %v475 = vpop.permute.xlu0 %474
        %477 = vrot.lane.b32.xlu0 %v470, 125
        %v478 = vpop.permute.xlu0 %477
        %480 = vrot.lane.b32.xlu0 %v468, 124
        %v481 = vpop.permute.xlu0 %480
        %vm482 = vcmask 1043456
        %v483 = vsel %vm482, %v468, %v472
        %v484 = vsel %vm482, %v475, %v478
        %486 = vset.pattern.permute.xlu0 0
        %487 = vperm.xlu0 %486, %v439
        %v488 = vpop.permute.xlu0 %487
        %491 = vset.pattern.permute.xlu0 0
        %492 = vperm.xlu0 %491, %v440
        %v493 = vpop.permute.xlu0 %492
        %vm495 = vcmask 162816
        %v497 = vsel %vm495, %v437, 0
        %v500 = vsel %vm495, %v438, 0
        %v502 = vsel %vm482, %v481, 0
        %504 = vmatprep.subr.mxu0 0.0
        %505 = vmatpush1.msra.mxu0 0.0
        %506 = vmatprep.subr.mxu0 0.0
        %507 = vmatpush1.msra.mxu0 0.0
        %508 = vmatprep.subr.mxu0 0.0
        %509 = vmatpush1.msra.mxu0 0.0
        %510 = vmatprep.subr.mxu0 0.0
        %511 = vmatpush1.msra.mxu0 0.0
        %512 = vmatprep.subr.mxu0 0.0
        %513 = vmatpush1.msra.mxu0 0.0
        %514 = vmatprep.subr.mxu0 0.0
        %515 = vmatpush1.msra.mxu0 0.0
        %516 = vmatprep.subr.mxu0 0.0
        %517 = vmatpush1.msra.mxu0 0.0
        %518 = vmatprep.subr.mxu0 0.0
        %519 = vmatpush1.msra.mxu0 0.0
        %520 = vmatprep.subr.mxu0 0.0
        %521 = vmatpush1.msra.mxu0 0.0
        %522 = vmatprep.subr.mxu0 0.0
        %523 = vmatpush1.msra.mxu0 0.0
        %524 = vmatprep.subr.mxu0 0.0
        %525 = vmatpush1.msra.mxu0 0.0
        %526 = vmatprep.subr.mxu0 0.0
        %527 = vmatpush1.msra.mxu0 0.0
        %528 = vmatprep.subr.mxu0 0.0
        %529 = vmatpush1.msra.mxu0 0.0
        %530 = vmatprep.subr.mxu0 0.0
        %531 = vmatpush1.msra.mxu0 %v502
        %532 = vmatprep.subr.mxu0 0.0
        %533 = vmatpush1.msra.mxu0 %v484
        %534 = vmatprep.subr.mxu0 0.0
        %535 = vmatpush1.msra.mxu0 %v483
        %536 = vmatprep.subr.mxu0 0.0
        %537 = vmatpush2.msra.mxu0 0.0
        %538 = vmatprep.subr.mxu0 0.0
        %539 = vmatpush2.msra.mxu0 0.0
        %540 = vmatprep.subr.mxu0 0.0
        %541 = vmatpush2.msra.mxu0 0.0
        %542 = vmatprep.subr.mxu0 0.0
        %543 = vmatpush2.msra.mxu0 0.0
        %544 = vmatprep.subr.mxu0 0.0
        %545 = vmatpush2.msra.mxu0 0.0
        %546 = vmatprep.subr.mxu0 0.0
        %547 = vmatpush2.msra.mxu0 0.0
        %548 = vmatprep.subr.mxu0 0.0
        %549 = vmatpush2.msra.mxu0 0.0
        %550 = vmatprep.subr.mxu0 0.0
        %551 = vmatpush2.msra.mxu0 0.0
        %552 = vmatprep.subr.mxu0 0.0
        %553 = vmatpush2.msra.mxu0 0.0
        %554 = vmatprep.subr.mxu0 0.0
        %555 = vmatpush2.msra.mxu0 0.0
        %556 = vmatprep.subr.mxu0 0.0
        %557 = vmatpush2.msra.mxu0 0.0
        %558 = vmatprep.subr.mxu0 0.0
        %559 = vmatpush2.msra.mxu0 0.0
        %560 = vmatprep.subr.mxu0 0.0
        %561 = vmatpush2.msra.mxu0 0.0
        %562 = vmatprep.subr.mxu0 0.0
        %563 = vmatpush2.msra.mxu0 0.0
        %564 = vmatprep.subr.mxu0 0.0
        %565 = vmatpush2.msra.mxu0 0.0
        %566 = vmatprep.subr.mxu0 0.0
        %567 = vmatpush2.msra.mxu0 0.0
        %568 = vmatprep.mubr.f32.mxu0 0.0
        %569 = vmatmul.mubr.f32.gmra.mxu0 %v497
        %v570 = vpop.f32.mrf.mxu0
        %v571 = vadd.f32 %v488, %v570
        %v572 = vpop.f32.mrf.mxu0
        %573 = vmatprep.mubr.f32.mxu0 0.0
        %574 = vmatmul.mubr.f32.gmra.mxu0 %v500
        %v575 = vpop.f32.mrf.mxu0
        %v576 = vadd.f32 %v493, %v575
        %v577 = vpop.f32.mrf.mxu0
        %578 = vdwg.mxu0
        %vm579 = vcmask 130048
        %v580 = vsel %vm579, %v571, 0.0
        %581 = vadd.xlane.f32.xlu0 %v580
        %v582 = vpop.xlane.xlu0 %581
        %v583 = vsel %vm579, %v576, 0.0
        %584 = vadd.xlane.f32.xlu0 %v583
        %v585 = vpop.xlane.xlu0 %584
        %v586 = vmul.f32 %v571, %v571
        %v587 = vmul.f32 %v576, %v576
        %v588 = vsel %vm579, %v586, 0.0
        %589 = vadd.xlane.f32.xlu0 %v588
        %v590 = vpop.xlane.xlu0 %589
        %v591 = vsel %vm579, %v587, 0.0
        %592 = vadd.xlane.f32.xlu0 %v591
        %v593 = vpop.xlane.xlu0 %592
        %v594 = vsel %vm461, %v582, %v590
        %v595 = vsel %vm461, %v585, %v593
        %v597 = vsel %vm579, %v445, 0
        %599 = vmatprep.subr.mxu0 0.0
        %600 = vmatpush1.msra.mxu0 0.0
        %601 = vmatprep.subr.mxu0 0.0
        %602 = vmatpush1.msra.mxu0 0.0
        %603 = vmatprep.subr.mxu0 0.0
        %604 = vmatpush1.msra.mxu0 0.0
        %605 = vmatprep.subr.mxu0 0.0
        %606 = vmatpush1.msra.mxu0 0.0
        %607 = vmatprep.subr.mxu0 0.0
        %608 = vmatpush1.msra.mxu0 0.0
        %609 = vmatprep.subr.mxu0 0.0
        %610 = vmatpush1.msra.mxu0 0.0
        %611 = vmatprep.subr.mxu0 0.0
        %612 = vmatpush1.msra.mxu0 0.0
        %613 = vmatprep.subr.mxu0 0.0
        %614 = vmatpush1.msra.mxu0 0.0
        %615 = vmatprep.subr.mxu0 0.0
        %616 = vmatpush1.msra.mxu0 0.0
        %617 = vmatprep.subr.mxu0 0.0
        %618 = vmatpush1.msra.mxu0 0.0
        %619 = vmatprep.subr.mxu0 0.0
        %620 = vmatpush1.msra.mxu0 0.0
        %621 = vmatprep.subr.mxu0 0.0
        %622 = vmatpush1.msra.mxu0 0.0
        %623 = vmatprep.subr.mxu0 0.0
        %624 = vmatpush1.msra.mxu0 0.0
        %625 = vmatprep.subr.mxu0 0.0
        %626 = vmatpush1.msra.mxu0 0.0
        %627 = vmatprep.subr.mxu0 0.0
        %628 = vmatpush1.msra.mxu0 %v595
        %629 = vmatprep.subr.mxu0 0.0
        %630 = vmatpush1.msra.mxu0 %v594
        %631 = vmatprep.subr.mxu0 0.0
        %632 = vmatpush2.msra.mxu0 0.0
        %633 = vmatprep.subr.mxu0 0.0
        %634 = vmatpush2.msra.mxu0 0.0
        %635 = vmatprep.subr.mxu0 0.0
        %636 = vmatpush2.msra.mxu0 0.0
        %637 = vmatprep.subr.mxu0 0.0
        %638 = vmatpush2.msra.mxu0 0.0
        %639 = vmatprep.subr.mxu0 0.0
        %640 = vmatpush2.msra.mxu0 0.0
        %641 = vmatprep.subr.mxu0 0.0
        %642 = vmatpush2.msra.mxu0 0.0
        %643 = vmatprep.subr.mxu0 0.0
        %644 = vmatpush2.msra.mxu0 0.0
        %645 = vmatprep.subr.mxu0 0.0
        %646 = vmatpush2.msra.mxu0 0.0
        %647 = vmatprep.subr.mxu0 0.0
        %648 = vmatpush2.msra.mxu0 0.0
        %649 = vmatprep.subr.mxu0 0.0
        %650 = vmatpush2.msra.mxu0 0.0
        %651 = vmatprep.subr.mxu0 0.0
        %652 = vmatpush2.msra.mxu0 0.0
        %653 = vmatprep.subr.mxu0 0.0
        %654 = vmatpush2.msra.mxu0 0.0
        %655 = vmatprep.subr.mxu0 0.0
        %656 = vmatpush2.msra.mxu0 0.0
        %657 = vmatprep.subr.mxu0 0.0
        %658 = vmatpush2.msra.mxu0 0.0
        %659 = vmatprep.subr.mxu0 0.0
        %660 = vmatpush2.msra.mxu0 0.0
        %661 = vmatprep.subr.mxu0 0.0
        %662 = vmatpush2.msra.mxu0 0.0
        %663 = vmatprep.mubr.f32.mxu0 0.0
        %664 = vmatmul.mubr.f32.gmra.mxu0 %v597
        %v665 = vpop.f32.mrf.mxu0
        %v666 = vadd.f32 0.0, %v665
        %v667 = vpop.f32.mrf.mxu0
        %668 = vdwg.mxu0
        %v669 = vmul.f32 %v666, 0.03125
        %v670 = vmul.f32 %v669, %v669
        %672 = vrot.lane.b32.xlu0 %v670, 1
        %v673 = vpop.permute.xlu0 %672
        %v675 = vsub.f32 %v669, %v673
        %v676 = vmax.f32 %v675, 0.0
        %v677 = vadd.f32 %v676, 1e-05
        %v678 = vrsqrt.pop %v677
        %v679 = vsel %vm461, %v669, %v678
        %vm680 = vcmask 64512
        %v682 = vsel %vm680, %v446, 0
        %v685 = vsel %vm680, %v447, 0
        %687 = vmatprep.subr.mxu0 0.0
        %688 = vmatpush1.msra.mxu0 0.0
        %689 = vmatprep.subr.mxu0 0.0
        %690 = vmatpush1.msra.mxu0 0.0
        %691 = vmatprep.subr.mxu0 0.0
        %692 = vmatpush1.msra.mxu0 0.0
        %693 = vmatprep.subr.mxu0 0.0
        %694 = vmatpush1.msra.mxu0 0.0
        %695 = vmatprep.subr.mxu0 0.0
        %696 = vmatpush1.msra.mxu0 0.0
        %697 = vmatprep.subr.mxu0 0.0
        %698 = vmatpush1.msra.mxu0 0.0
        %699 = vmatprep.subr.mxu0 0.0
        %700 = vmatpush1.msra.mxu0 0.0
        %701 = vmatprep.subr.mxu0 0.0
        %702 = vmatpush1.msra.mxu0 0.0
        %703 = vmatprep.subr.mxu0 0.0
        %704 = vmatpush1.msra.mxu0 0.0
        %705 = vmatprep.subr.mxu0 0.0
        %706 = vmatpush1.msra.mxu0 0.0
        %707 = vmatprep.subr.mxu0 0.0
        %708 = vmatpush1.msra.mxu0 0.0
        %709 = vmatprep.subr.mxu0 0.0
        %710 = vmatpush1.msra.mxu0 0.0
        %711 = vmatprep.subr.mxu0 0.0
        %712 = vmatpush1.msra.mxu0 0.0
        %713 = vmatprep.subr.mxu0 0.0
        %714 = vmatpush1.msra.mxu0 0.0
        %715 = vmatprep.subr.mxu0 0.0
        %716 = vmatpush1.msra.mxu0 0.0
        %717 = vmatprep.subr.mxu0 0.0
        %718 = vmatpush1.msra.mxu0 %v679
        %719 = vmatprep.subr.mxu0 0.0
        %720 = vmatpush2.msra.mxu0 0.0
        %721 = vmatprep.subr.mxu0 0.0
        %722 = vmatpush2.msra.mxu0 0.0
        %723 = vmatprep.subr.mxu0 0.0
        %724 = vmatpush2.msra.mxu0 0.0
        %725 = vmatprep.subr.mxu0 0.0
        %726 = vmatpush2.msra.mxu0 0.0
        %727 = vmatprep.subr.mxu0 0.0
        %728 = vmatpush2.msra.mxu0 0.0
        %729 = vmatprep.subr.mxu0 0.0
        %730 = vmatpush2.msra.mxu0 0.0
        %731 = vmatprep.subr.mxu0 0.0
        %732 = vmatpush2.msra.mxu0 0.0
        %733 = vmatprep.subr.mxu0 0.0
        %734 = vmatpush2.msra.mxu0 0.0
        %735 = vmatprep.subr.mxu0 0.0
        %736 = vmatpush2.msra.mxu0 0.0
        %737 = vmatprep.subr.mxu0 0.0
        %738 = vmatpush2.msra.mxu0 0.0
        %739 = vmatprep.subr.mxu0 0.0
        %740 = vmatpush2.msra.mxu0 0.0
        %741 = vmatprep.subr.mxu0 0.0
        %742 = vmatpush2.msra.mxu0 0.0
        %743 = vmatprep.subr.mxu0 0.0
        %744 = vmatpush2.msra.mxu0 0.0
        %745 = vmatprep.subr.mxu0 0.0
        %746 = vmatpush2.msra.mxu0 0.0
        %747 = vmatprep.subr.mxu0 0.0
        %748 = vmatpush2.msra.mxu0 0.0
        %749 = vmatprep.subr.mxu0 0.0
        %750 = vmatpush2.msra.mxu0 0.0
        %751 = vmatprep.mubr.f32.mxu0 0.0
        %752 = vmatmul.mubr.f32.gmra.mxu0 %v682
        %v753 = vpop.f32.mrf.mxu0
        %v754 = vadd.f32 0.0, %v753
        %v755 = vpop.f32.mrf.mxu0
        %756 = vmatprep.mubr.f32.mxu0 0.0
        %757 = vmatmul.mubr.f32.gmra.mxu0 %v685
        %v758 = vpop.f32.mrf.mxu0
        %v759 = vadd.f32 0.0, %v758
        %v760 = vpop.f32.mrf.mxu0
        %761 = vdwg.mxu0
        %763 = vset.pattern.permute.xlu0 0
        %764 = vperm.xlu0 %763, %v754
        %v765 = vpop.permute.xlu0 %764
        %768 = vset.pattern.permute.xlu0 0
        %769 = vperm.xlu0 %768, %v759
        %v770 = vpop.permute.xlu0 %769
        %v772 = vsub.f32 %v571, %v765
        %v773 = vsub.f32 %v576, %v770
        %774 = vset.pattern.permute.xlu0 1
        %775 = vperm.xlu0 %774, %v754
        %v776 = vpop.permute.xlu0 %775
        %778 = vset.pattern.permute.xlu0 1
        %779 = vperm.xlu0 %778, %v759
        %v780 = vpop.permute.xlu0 %779
        %v782 = vmul.f32 %v772, %v776
        %v783 = vmul.f32 %v773, %v780
        %785 = vset.pattern.permute.xlu0 0
        %786 = vperm.xlu0 %785, %v441
        %v787 = vpop.permute.xlu0 %786
        %790 = vset.pattern.permute.xlu0 0
        %791 = vperm.xlu0 %790, %v442
        %v792 = vpop.permute.xlu0 %791
        %v794 = vmul.f32 %v782, %v787
        %v795 = vmul.f32 %v783, %v792
        %797 = vset.pattern.permute.xlu0 0
        %798 = vperm.xlu0 %797, %v443
        %v799 = vpop.permute.xlu0 %798
        %802 = vset.pattern.permute.xlu0 0
        %803 = vperm.xlu0 %802, %v444
        %v804 = vpop.permute.xlu0 %803
        %v806 = vadd.f32 %v794, %v799
        %v807 = vadd.f32 %v795, %v804
        %v808 = vmin.f32 %v806, 20.0
        %v809 = vmin.f32 %v807, 20.0
        %v810 = vmul.f32 %v808, 1.442695
        %v811 = vpow.pop %v810
        %v812 = vmul.f32 %v809, 1.442695
        %v813 = vpow.pop %v812
        %v814 = vadd.f32 %v811, 2.0
        %v815 = vadd.f32 %v813, 2.0
        %v816 = vmul.f32 %v811, %v814
        %v817 = vmul.f32 %v813, %v815
        %vm818 = vcmp.gt.f32.partialorder %v806, 20.0
        %vm819 = vcmp.gt.f32.partialorder %v807, 20.0
        %v820 = vmul.f32 %v806, %v816
        %v821 = vmul.f32 %v807, %v817
        %v822 = vadd.f32 %v816, 2.0
        %v823 = vadd.f32 %v817, 2.0
        %v824 = vrcp.pop %v822
        %v825 = vmul.f32 %v820, %v824
        %v826 = vrcp.pop %v823
        %v827 = vmul.f32 %v821, %v826
        %v828 = vsel %vm818, %v806, %v825
        %v829 = vsel %vm819, %v807, %v827
        %v830 = vld [vmem:[%s5] sm:$0xff]
        %v831 = vld [vmem:[%s5 + $0x8] sm:$0xff]
        %v832 = vld [vmem:[%s6] sm:$0xff]
        %v833 = vld [vmem:[%s6 + $0x8] sm:$0xff]
        %v834 = vld [vmem:[%s7] sm:$0xff]
        %v835 = vld [vmem:[%s7 + $0x8] sm:$0xff]
        %v836 = vld [vmem:[%s8] sm:$0xff]
        %v837 = vld [vmem:[%s8 + $0x8] sm:$0xff]
        %840 = vrot.lane.b32.xlu0 %v828, 126
        %v841 = vpop.permute.xlu0 %840
        %842 = vrot.lane.b32.xlu0 %v829, 126
        %v843 = vpop.permute.xlu0 %842
        %846 = vrot.lane.b32.xlu0 %v828, 2
        %v847 = vpop.permute.xlu0 %846
        %848 = vrot.lane.b32.xlu0 %v829, 2
        %v849 = vpop.permute.xlu0 %848
        %852 = vrot.lane.b32.xlu0 %v828, 4
        %v853 = vpop.permute.xlu0 %852
        %854 = vrot.lane.b32.xlu0 %v829, 4
        %v855 = vpop.permute.xlu0 %854
        %858 = vrot.lane.b32.xlu0 %v828, 6
        %v859 = vpop.permute.xlu0 %858
        %860 = vrot.lane.b32.xlu0 %v829, 6
        %v861 = vpop.permute.xlu0 %860
        %v864 = vsel %vm461, %v841, %v828
        %v865 = vsel %vm461, %v843, %v829
        %v866 = vsel %vm463, %v864, %v847
        %v867 = vsel %vm463, %v865, %v849
        %v868 = vsel %vm465, %v866, %v853
        %v869 = vsel %vm465, %v867, %v855
        %v870 = vsel %vm467, %v868, %v859
        %v871 = vsel %vm467, %v869, %v861
        %874 = vrot.lane.b32.xlu0 %v870, 127
        %v875 = vpop.permute.xlu0 %874
        %876 = vrot.lane.b32.xlu0 %v871, 127
        %v877 = vpop.permute.xlu0 %876
        %880 = vrot.lane.b32.xlu0 %v870, 126
        %v881 = vpop.permute.xlu0 %880
        %882 = vrot.lane.b32.xlu0 %v871, 126
        %v883 = vpop.permute.xlu0 %882
        %886 = vrot.lane.b32.xlu0 %v870, 125
        %v887 = vpop.permute.xlu0 %886
        %888 = vrot.lane.b32.xlu0 %v871, 125
        %v889 = vpop.permute.xlu0 %888
        %892 = vrot.lane.b32.xlu0 %v870, 124
        %v893 = vpop.permute.xlu0 %892
        %894 = vrot.lane.b32.xlu0 %v871, 124
        %v895 = vpop.permute.xlu0 %894
        %899 = vset.pattern.permute.xlu0 0
        %900 = vperm.xlu0 %899, %v832
        %v901 = vpop.permute.xlu0 %900
        %904 = vset.pattern.permute.xlu0 0
        %905 = vperm.xlu0 %904, %v833
        %v906 = vpop.permute.xlu0 %905
        %vm908 = vcmask 654336
        %v910 = vsel %vm908, %v830, 0
        %v913 = vsel %vm908, %v831, 0
        %915 = vmatprep.subr.mxu0 0.0
        %916 = vmatpush1.msra.mxu0 0.0
        %917 = vmatprep.subr.mxu0 0.0
        %918 = vmatpush1.msra.mxu0 0.0
        %919 = vmatprep.subr.mxu0 0.0
        %920 = vmatpush1.msra.mxu0 0.0
        %921 = vmatprep.subr.mxu0 0.0
        %922 = vmatpush1.msra.mxu0 0.0
        %923 = vmatprep.subr.mxu0 0.0
        %924 = vmatpush1.msra.mxu0 0.0
        %925 = vmatprep.subr.mxu0 0.0
        %926 = vmatpush1.msra.mxu0 0.0
        %927 = vmatprep.subr.mxu0 0.0
        %928 = vmatpush1.msra.mxu0 %v895
        %929 = vmatprep.subr.mxu0 0.0
        %930 = vmatpush1.msra.mxu0 %v893
        %931 = vmatprep.subr.mxu0 0.0
        %932 = vmatpush1.msra.mxu0 %v889
        %933 = vmatprep.subr.mxu0 0.0
        %934 = vmatpush1.msra.mxu0 %v887
        %935 = vmatprep.subr.mxu0 0.0
        %936 = vmatpush1.msra.mxu0 %v883
        %937 = vmatprep.subr.mxu0 0.0
        %938 = vmatpush1.msra.mxu0 %v881
        %939 = vmatprep.subr.mxu0 0.0
        %940 = vmatpush1.msra.mxu0 %v877
        %941 = vmatprep.subr.mxu0 0.0
        %942 = vmatpush1.msra.mxu0 %v875
        %943 = vmatprep.subr.mxu0 0.0
        %944 = vmatpush1.msra.mxu0 %v871
        %945 = vmatprep.subr.mxu0 0.0
        %946 = vmatpush1.msra.mxu0 %v870
        %947 = vmatprep.subr.mxu0 0.0
        %948 = vmatpush2.msra.mxu0 0.0
        %949 = vmatprep.subr.mxu0 0.0
        %950 = vmatpush2.msra.mxu0 0.0
        %951 = vmatprep.subr.mxu0 0.0
        %952 = vmatpush2.msra.mxu0 0.0
        %953 = vmatprep.subr.mxu0 0.0
        %954 = vmatpush2.msra.mxu0 0.0
        %955 = vmatprep.subr.mxu0 0.0
        %956 = vmatpush2.msra.mxu0 0.0
        %957 = vmatprep.subr.mxu0 0.0
        %958 = vmatpush2.msra.mxu0 0.0
        %959 = vmatprep.subr.mxu0 0.0
        %960 = vmatpush2.msra.mxu0 0.0
        %961 = vmatprep.subr.mxu0 0.0
        %962 = vmatpush2.msra.mxu0 0.0
        %963 = vmatprep.subr.mxu0 0.0
        %964 = vmatpush2.msra.mxu0 0.0
        %965 = vmatprep.subr.mxu0 0.0
        %966 = vmatpush2.msra.mxu0 0.0
        %967 = vmatprep.subr.mxu0 0.0
        %968 = vmatpush2.msra.mxu0 0.0
        %969 = vmatprep.subr.mxu0 0.0
        %970 = vmatpush2.msra.mxu0 0.0
        %971 = vmatprep.subr.mxu0 0.0
        %972 = vmatpush2.msra.mxu0 0.0
        %973 = vmatprep.subr.mxu0 0.0
        %974 = vmatpush2.msra.mxu0 0.0
        %975 = vmatprep.subr.mxu0 0.0
        %976 = vmatpush2.msra.mxu0 0.0
        %977 = vmatprep.subr.mxu0 0.0
        %978 = vmatpush2.msra.mxu0 0.0
        %979 = vmatprep.mubr.f32.mxu0 0.0
        %980 = vmatmul.mubr.f32.gmra.mxu0 %v910
        %v981 = vpop.f32.mrf.mxu0
        %v982 = vadd.f32 %v901, %v981
        %v983 = vpop.f32.mrf.mxu0
        %984 = vmatprep.mubr.f32.mxu0 0.0
        %985 = vmatmul.mubr.f32.gmra.mxu0 %v913
        %v986 = vpop.f32.mrf.mxu0
        %v987 = vadd.f32 %v906, %v986
        %v988 = vpop.f32.mrf.mxu0
        %989 = vdwg.mxu0
        %v990 = vsel %vm579, %v982, 0.0
        %991 = vadd.xlane.f32.xlu0 %v990
        %v992 = vpop.xlane.xlu0 %991
        %v993 = vsel %vm579, %v987, 0.0
        %994 = vadd.xlane.f32.xlu0 %v993
        %v995 = vpop.xlane.xlu0 %994
        %v996 = vmul.f32 %v982, %v982
        %v997 = vmul.f32 %v987, %v987
        %v998 = vsel %vm579, %v996, 0.0
        %999 = vadd.xlane.f32.xlu0 %v998
        %v1000 = vpop.xlane.xlu0 %999
        %v1001 = vsel %vm579, %v997, 0.0
        %1002 = vadd.xlane.f32.xlu0 %v1001
        %v1003 = vpop.xlane.xlu0 %1002
        %v1004 = vsel %vm461, %v992, %v1000
        %v1005 = vsel %vm461, %v995, %v1003
        %1006 = vmatprep.subr.mxu0 0.0
        %1007 = vmatpush1.msra.mxu0 0.0
        %1008 = vmatprep.subr.mxu0 0.0
        %1009 = vmatpush1.msra.mxu0 0.0
        %1010 = vmatprep.subr.mxu0 0.0
        %1011 = vmatpush1.msra.mxu0 0.0
        %1012 = vmatprep.subr.mxu0 0.0
        %1013 = vmatpush1.msra.mxu0 0.0
        %1014 = vmatprep.subr.mxu0 0.0
        %1015 = vmatpush1.msra.mxu0 0.0
        %1016 = vmatprep.subr.mxu0 0.0
        %1017 = vmatpush1.msra.mxu0 0.0
        %1018 = vmatprep.subr.mxu0 0.0
        %1019 = vmatpush1.msra.mxu0 0.0
        %1020 = vmatprep.subr.mxu0 0.0
        %1021 = vmatpush1.msra.mxu0 0.0
        %1022 = vmatprep.subr.mxu0 0.0
        %1023 = vmatpush1.msra.mxu0 0.0
        %1024 = vmatprep.subr.mxu0 0.0
        %1025 = vmatpush1.msra.mxu0 0.0
        %1026 = vmatprep.subr.mxu0 0.0
        %1027 = vmatpush1.msra.mxu0 0.0
        %1028 = vmatprep.subr.mxu0 0.0
        %1029 = vmatpush1.msra.mxu0 0.0
        %1030 = vmatprep.subr.mxu0 0.0
        %1031 = vmatpush1.msra.mxu0 0.0
        %1032 = vmatprep.subr.mxu0 0.0
        %1033 = vmatpush1.msra.mxu0 0.0
        %1034 = vmatprep.subr.mxu0 0.0
        %1035 = vmatpush1.msra.mxu0 %v1005
        %1036 = vmatprep.subr.mxu0 0.0
        %1037 = vmatpush1.msra.mxu0 %v1004
        %1038 = vmatprep.subr.mxu0 0.0
        %1039 = vmatpush2.msra.mxu0 0.0
        %1040 = vmatprep.subr.mxu0 0.0
        %1041 = vmatpush2.msra.mxu0 0.0
        %1042 = vmatprep.subr.mxu0 0.0
        %1043 = vmatpush2.msra.mxu0 0.0
        %1044 = vmatprep.subr.mxu0 0.0
        %1045 = vmatpush2.msra.mxu0 0.0
        %1046 = vmatprep.subr.mxu0 0.0
        %1047 = vmatpush2.msra.mxu0 0.0
        %1048 = vmatprep.subr.mxu0 0.0
        %1049 = vmatpush2.msra.mxu0 0.0
        %1050 = vmatprep.subr.mxu0 0.0
        %1051 = vmatpush2.msra.mxu0 0.0
        %1052 = vmatprep.subr.mxu0 0.0
        %1053 = vmatpush2.msra.mxu0 0.0
        %1054 = vmatprep.subr.mxu0 0.0
        %1055 = vmatpush2.msra.mxu0 0.0
        %1056 = vmatprep.subr.mxu0 0.0
        %1057 = vmatpush2.msra.mxu0 0.0
        %1058 = vmatprep.subr.mxu0 0.0
        %1059 = vmatpush2.msra.mxu0 0.0
        %1060 = vmatprep.subr.mxu0 0.0
        %1061 = vmatpush2.msra.mxu0 0.0
        %1062 = vmatprep.subr.mxu0 0.0
        %1063 = vmatpush2.msra.mxu0 0.0
        %1064 = vmatprep.subr.mxu0 0.0
        %1065 = vmatpush2.msra.mxu0 0.0
        %1066 = vmatprep.subr.mxu0 0.0
        %1067 = vmatpush2.msra.mxu0 0.0
        %1068 = vmatprep.subr.mxu0 0.0
        %1069 = vmatpush2.msra.mxu0 0.0
        %1070 = vmatprep.mubr.f32.mxu0 0.0
        %1071 = vmatmul.mubr.f32.gmra.mxu0 %v597
        %v1072 = vpop.f32.mrf.mxu0
        %v1073 = vadd.f32 0.0, %v1072
        %v1074 = vpop.f32.mrf.mxu0
        %1075 = vdwg.mxu0
        %v1076 = vmul.f32 %v1073, 0.03125
        %v1077 = vmul.f32 %v1076, %v1076
        %1079 = vrot.lane.b32.xlu0 %v1077, 1
        %v1080 = vpop.permute.xlu0 %1079
        %v1082 = vsub.f32 %v1076, %v1080
        %v1083 = vmax.f32 %v1082, 0.0
        %v1084 = vadd.f32 %v1083, 1e-05
        %v1085 = vrsqrt.pop %v1084
        %v1086 = vsel %vm461, %v1076, %v1085
        %1087 = vmatprep.subr.mxu0 0.0
        %1088 = vmatpush1.msra.mxu0 0.0
        %1089 = vmatprep.subr.mxu0 0.0
        %1090 = vmatpush1.msra.mxu0 0.0
        %1091 = vmatprep.subr.mxu0 0.0
        %1092 = vmatpush1.msra.mxu0 0.0
        %1093 = vmatprep.subr.mxu0 0.0
        %1094 = vmatpush1.msra.mxu0 0.0
        %1095 = vmatprep.subr.mxu0 0.0
        %1096 = vmatpush1.msra.mxu0 0.0
        %1097 = vmatprep.subr.mxu0 0.0
        %1098 = vmatpush1.msra.mxu0 0.0
        %1099 = vmatprep.subr.mxu0 0.0
        %1100 = vmatpush1.msra.mxu0 0.0
        %1101 = vmatprep.subr.mxu0 0.0
        %1102 = vmatpush1.msra.mxu0 0.0
        %1103 = vmatprep.subr.mxu0 0.0
        %1104 = vmatpush1.msra.mxu0 0.0
        %1105 = vmatprep.subr.mxu0 0.0
        %1106 = vmatpush1.msra.mxu0 0.0
        %1107 = vmatprep.subr.mxu0 0.0
        %1108 = vmatpush1.msra.mxu0 0.0
        %1109 = vmatprep.subr.mxu0 0.0
        %1110 = vmatpush1.msra.mxu0 0.0
        %1111 = vmatprep.subr.mxu0 0.0
        %1112 = vmatpush1.msra.mxu0 0.0
        %1113 = vmatprep.subr.mxu0 0.0
        %1114 = vmatpush1.msra.mxu0 0.0
        %1115 = vmatprep.subr.mxu0 0.0
        %1116 = vmatpush1.msra.mxu0 0.0
        %1117 = vmatprep.subr.mxu0 0.0
        %1118 = vmatpush1.msra.mxu0 %v1086
        %1119 = vmatprep.subr.mxu0 0.0
        %1120 = vmatpush2.msra.mxu0 0.0
        %1121 = vmatprep.subr.mxu0 0.0
        %1122 = vmatpush2.msra.mxu0 0.0
        %1123 = vmatprep.subr.mxu0 0.0
        %1124 = vmatpush2.msra.mxu0 0.0
        %1125 = vmatprep.subr.mxu0 0.0
        %1126 = vmatpush2.msra.mxu0 0.0
        %1127 = vmatprep.subr.mxu0 0.0
        %1128 = vmatpush2.msra.mxu0 0.0
        %1129 = vmatprep.subr.mxu0 0.0
        %1130 = vmatpush2.msra.mxu0 0.0
        %1131 = vmatprep.subr.mxu0 0.0
        %1132 = vmatpush2.msra.mxu0 0.0
        %1133 = vmatprep.subr.mxu0 0.0
        %1134 = vmatpush2.msra.mxu0 0.0
        %1135 = vmatprep.subr.mxu0 0.0
        %1136 = vmatpush2.msra.mxu0 0.0
        %1137 = vmatprep.subr.mxu0 0.0
        %1138 = vmatpush2.msra.mxu0 0.0
        %1139 = vmatprep.subr.mxu0 0.0
        %1140 = vmatpush2.msra.mxu0 0.0
        %1141 = vmatprep.subr.mxu0 0.0
        %1142 = vmatpush2.msra.mxu0 0.0
        %1143 = vmatprep.subr.mxu0 0.0
        %1144 = vmatpush2.msra.mxu0 0.0
        %1145 = vmatprep.subr.mxu0 0.0
        %1146 = vmatpush2.msra.mxu0 0.0
        %1147 = vmatprep.subr.mxu0 0.0
        %1148 = vmatpush2.msra.mxu0 0.0
        %1149 = vmatprep.subr.mxu0 0.0
        %1150 = vmatpush2.msra.mxu0 0.0
        %1151 = vmatprep.mubr.f32.mxu0 0.0
        %1152 = vmatmul.mubr.f32.gmra.mxu0 %v682
        %v1153 = vpop.f32.mrf.mxu0
        %v1154 = vadd.f32 0.0, %v1153
        %v1155 = vpop.f32.mrf.mxu0
        %1156 = vmatprep.mubr.f32.mxu0 0.0
        %1157 = vmatmul.mubr.f32.gmra.mxu0 %v685
        %v1158 = vpop.f32.mrf.mxu0
        %v1159 = vadd.f32 0.0, %v1158
        %v1160 = vpop.f32.mrf.mxu0
        %1161 = vdwg.mxu0
        %1163 = vset.pattern.permute.xlu0 0
        %1164 = vperm.xlu0 %1163, %v1154
        %v1165 = vpop.permute.xlu0 %1164
        %1168 = vset.pattern.permute.xlu0 0
        %1169 = vperm.xlu0 %1168, %v1159
        %v1170 = vpop.permute.xlu0 %1169
        %v1172 = vsub.f32 %v982, %v1165
        %v1173 = vsub.f32 %v987, %v1170
        %1174 = vset.pattern.permute.xlu0 1
        %1175 = vperm.xlu0 %1174, %v1154
        %v1176 = vpop.permute.xlu0 %1175
        %1178 = vset.pattern.permute.xlu0 1
        %1179 = vperm.xlu0 %1178, %v1159
        %v1180 = vpop.permute.xlu0 %1179
        %v1182 = vmul.f32 %v1172, %v1176
        %v1183 = vmul.f32 %v1173, %v1180
        %1185 = vset.pattern.permute.xlu0 0
        %1186 = vperm.xlu0 %1185, %v834
        %v1187 = vpop.permute.xlu0 %1186
        %1190 = vset.pattern.permute.xlu0 0
        %1191 = vperm.xlu0 %1190, %v835
        %v1192 = vpop.permute.xlu0 %1191
        %v1194 = vmul.f32 %v1182, %v1187
        %v1195 = vmul.f32 %v1183, %v1192
        %1197 = vset.pattern.permute.xlu0 0
        %1198 = vperm.xlu0 %1197, %v836
        %v1199 = vpop.permute.xlu0 %1198
        %1202 = vset.pattern.permute.xlu0 0
        %1203 = vperm.xlu0 %1202, %v837
        %v1204 = vpop.permute.xlu0 %1203
        %v1206 = vadd.f32 %v1194, %v1199
        %v1207 = vadd.f32 %v1195, %v1204
        %v1208 = vmin.f32 %v1206, 20.0
        %v1209 = vmin.f32 %v1207, 20.0
        %v1210 = vmul.f32 %v1208, 1.442695
        %v1211 = vpow.pop %v1210
        %v1212 = vmul.f32 %v1209, 1.442695
        %v1213 = vpow.pop %v1212
        %v1214 = vadd.f32 %v1211, 2.0
        %v1215 = vadd.f32 %v1213, 2.0
        %v1216 = vmul.f32 %v1211, %v1214
        %v1217 = vmul.f32 %v1213, %v1215
        %vm1218 = vcmp.gt.f32.partialorder %v1206, 20.0
        %vm1219 = vcmp.gt.f32.partialorder %v1207, 20.0
        %v1220 = vmul.f32 %v1206, %v1216
        %v1221 = vmul.f32 %v1207, %v1217
        %v1222 = vadd.f32 %v1216, 2.0
        %v1223 = vadd.f32 %v1217, 2.0
        %v1224 = vrcp.pop %v1222
        %v1225 = vmul.f32 %v1220, %v1224
        %v1226 = vrcp.pop %v1223
        %v1227 = vmul.f32 %v1221, %v1226
        %v1228 = vsel %vm1218, %v1206, %v1225
        %v1229 = vsel %vm1219, %v1207, %v1227
        %v1230 = vld [vmem:[%s11] sm:$0xff]
        %v1231 = vld [vmem:[%s11 + $0x8] sm:$0xff]
        %v1232 = vld [vmem:[%s12] sm:$0xff]
        %v1233 = vld [vmem:[%s12 + $0x8] sm:$0xff]
        %1235 = vset.pattern.permute.xlu0 0
        %1236 = vperm.xlu0 %1235, %v1232
        %v1237 = vpop.permute.xlu0 %1236
        %1240 = vset.pattern.permute.xlu0 0
        %1241 = vperm.xlu0 %1240, %v1233
        %v1242 = vpop.permute.xlu0 %1241
        %vm1244 = vcmask 31744
        %v1246 = vsel %vm1244, %v1230, 0
        %v1249 = vsel %vm1244, %v1231, 0
        %v1251 = vsel %vm482, %v436, 0
        %1253 = vmatprep.subr.mxu0 0.0
        %1254 = vmatpush1.msra.mxu0 0.0
        %1255 = vmatprep.subr.mxu0 0.0
        %1256 = vmatpush1.msra.mxu0 0.0
        %1257 = vmatprep.subr.mxu0 0.0
        %1258 = vmatpush1.msra.mxu0 0.0
        %1259 = vmatprep.subr.mxu0 0.0
        %1260 = vmatpush1.msra.mxu0 0.0
        %1261 = vmatprep.subr.mxu0 0.0
        %1262 = vmatpush1.msra.mxu0 0.0
        %1263 = vmatprep.subr.mxu0 0.0
        %1264 = vmatpush1.msra.mxu0 0.0
        %1265 = vmatprep.subr.mxu0 0.0
        %1266 = vmatpush1.msra.mxu0 0.0
        %1267 = vmatprep.subr.mxu0 0.0
        %1268 = vmatpush1.msra.mxu0 0.0
        %1269 = vmatprep.subr.mxu0 0.0
        %1270 = vmatpush1.msra.mxu0 0.0
        %1271 = vmatprep.subr.mxu0 0.0
        %1272 = vmatpush1.msra.mxu0 0.0
        %1273 = vmatprep.subr.mxu0 0.0
        %1274 = vmatpush1.msra.mxu0 0.0
        %1275 = vmatprep.subr.mxu0 0.0
        %1276 = vmatpush1.msra.mxu0 0.0
        %1277 = vmatprep.subr.mxu0 0.0
        %1278 = vmatpush1.msra.mxu0 0.0
        %1279 = vmatprep.subr.mxu0 0.0
        %1280 = vmatpush1.msra.mxu0 0.0
        %1281 = vmatprep.subr.mxu0 0.0
        %1282 = vmatpush1.msra.mxu0 0.0
        %1283 = vmatprep.subr.mxu0 0.0
        %1284 = vmatpush1.msra.mxu0 %v1251
        %1285 = vmatprep.subr.mxu0 0.0
        %1286 = vmatpush2.msra.mxu0 0.0
        %1287 = vmatprep.subr.mxu0 0.0
        %1288 = vmatpush2.msra.mxu0 0.0
        %1289 = vmatprep.subr.mxu0 0.0
        %1290 = vmatpush2.msra.mxu0 0.0
        %1291 = vmatprep.subr.mxu0 0.0
        %1292 = vmatpush2.msra.mxu0 0.0
        %1293 = vmatprep.subr.mxu0 0.0
        %1294 = vmatpush2.msra.mxu0 0.0
        %1295 = vmatprep.subr.mxu0 0.0
        %1296 = vmatpush2.msra.mxu0 0.0
        %1297 = vmatprep.subr.mxu0 0.0
        %1298 = vmatpush2.msra.mxu0 0.0
        %1299 = vmatprep.subr.mxu0 0.0
        %1300 = vmatpush2.msra.mxu0 0.0
        %1301 = vmatprep.subr.mxu0 0.0
        %1302 = vmatpush2.msra.mxu0 0.0
        %1303 = vmatprep.subr.mxu0 0.0
        %1304 = vmatpush2.msra.mxu0 0.0
        %1305 = vmatprep.subr.mxu0 0.0
        %1306 = vmatpush2.msra.mxu0 0.0
        %1307 = vmatprep.subr.mxu0 0.0
        %1308 = vmatpush2.msra.mxu0 0.0
        %1309 = vmatprep.subr.mxu0 0.0
        %1310 = vmatpush2.msra.mxu0 0.0
        %1311 = vmatprep.subr.mxu0 0.0
        %1312 = vmatpush2.msra.mxu0 0.0
        %1313 = vmatprep.subr.mxu0 0.0
        %1314 = vmatpush2.msra.mxu0 0.0
        %1315 = vmatprep.subr.mxu0 0.0
        %1316 = vmatpush2.msra.mxu0 0.0
        %1317 = vmatprep.mubr.f32.mxu0 0.0
        %1318 = vmatmul.mubr.f32.gmra.mxu0 %v1246
        %v1319 = vpop.f32.mrf.mxu0
        %v1320 = vadd.f32 %v1237, %v1319
        %v1321 = vpop.f32.mrf.mxu0
        %1322 = vmatprep.mubr.f32.mxu0 0.0
        %1323 = vmatmul.mubr.f32.gmra.mxu0 %v1249
        %v1324 = vpop.f32.mrf.mxu0
        %v1325 = vadd.f32 %v1242, %v1324
        %v1326 = vpop.f32.mrf.mxu0
        %1327 = vdwg.mxu0
        %v1328 = vadd.f32 %v1228, %v1320
        %v1329 = vadd.f32 %v1229, %v1325
        %1330 = vst.msk [vmem:[%s431] sm:$0xff] %vm579, %v1328
        %1331 = vst.msk [vmem:[%s431 + $0x8] sm:$0xff] %vm579, %v1329
        %s1332 = sand.u32 %s313, 1
        %s1333 = scalar_lea.sflag [#allocation3], %s1332
        %s1334 = sand.u32 %s313, 1
        %s1335 = smul.addr %s1334, 16
        %s1336 = scalar_lea.vmem [#allocation2], %s1335
        // Predicated region
        $region73: #{tpu_custom_call.1} parent=71 // pred_check
          %p1337 = pneg %p323
        $region74: #{tpu_custom_call.1} parent=71 // pred_check_branch
          %1339 = sbr.rel (%p1337) target = $region76
        $region75: #{tpu_custom_call.1} parent=71 // pred_region
          %s1341 = ssub.s32 256, 256
          %1342 = vsyncadd %s1333, %s1341
          %s1343 = smul.addr %s27, 2
          %s1344 = smul.addr %s1343, 128
          %s1345 = scalar_lea.hbm %s13, %s1344
          %s1346 = sshll.u32 %s1336, 4
          %s1347 = int_to_ptr.vmem [resolvable:$true] %s1346
          %1352 = dma.vmem_to_hbm [thread:$0]  %s1347, 256, %s1345, %s1333, 128, 128, 8
        $region76: #{tpu_custom_call.1} parent=71 // pred_fallthru
          _
      $region72: #{tpu_custom_call.1} parent=5 // pred_fallthru
        _
      %p1353 = scmp.le.s32.totalorder 2, %s22
      // Predicated region
      $region77: #{tpu_custom_call.1} parent=5 // pred_check
        %p1354 = pneg %p1353
      $region78: #{tpu_custom_call.1} parent=5 // pred_check_branch
        %1356 = sbr.rel (%p1354) target = $region80
      $region79: #{tpu_custom_call.1} parent=5 // pred_region
        %s1357 = ssub.s32 %s22, 2
        // Predicated region
        $region81: #{tpu_custom_call.1} parent=79 // pred_check
          %p1358 = pneg %p329
        $region82: #{tpu_custom_call.1} parent=79 // pred_check_branch
          %1360 = sbr.rel (%p1358) target = $region84
        $region83: #{tpu_custom_call.1} parent=79 // pred_region
          %s1361 = sand.u32 %s314, 1
          %s1362 = scalar_lea.sflag [#allocation3], %s1361
          %s1363 = sand.u32 %s314, 1
          %s1364 = smul.addr %s1363, 16
          %s1365 = scalar_lea.vmem [#allocation2], %s1364
          %1366 = dma.done %s1362, 256
        $region84: #{tpu_custom_call.1} parent=79 // pred_fallthru
          _
      $region80: #{tpu_custom_call.1} parent=5 // pred_fallthru
        _
    $region6: #{tpu_custom_call.1} parent=1 // loop_footer
      %s26 = sadd.s32 1, %s22
    $region7: #{tpu_custom_call.1} parent=1 // loop_footer_branch
      %21 = sbr.rel target = $region3
    $region8: #{tpu_custom_call.1} parent=1 // loop_exit
      _
    %1367 = vsyncpa [#allocation3], 1
    %s1368 = scalar_lea.sflag [#allocation3], 1
    %1369 = vsyncpa %s1368, 1

</llo_original>
